<compile_context>
chip_gen: v6e
topology: v6e:2x2x1
jax: 0.10.0
libtpu: 0.0.40
codegen_flags: <defaults>
</compile_context>

<pallas_src>
import functools

import jax
import jax.numpy as jnp
from jax import lax
from jax.experimental import pallas as pl
from jax.experimental.pallas import tpu as pltpu
import numpy as np


def _round_up(x, m):
    return ((x + m - 1) // m) * m


def _seq_classifier_kernel(x_ref, w1_ref, b1_ref, w2_ref, b2_ref, w3_ref, b3_ref,
                           fw1_ref, fb1_ref, fw2_ref, fb2_ref, out_ref,
                           *, kernel_size, in_channels, seq_len, valid_len, token_input):
    K = kernel_size
    M = x_ref.shape[0]          # TB * seq_len (flattened batch*sequence rows)
    TB = out_ref.shape[0]

    if token_input:
        tok = x_ref[...]                                             # (M, 1) int32
        cls = lax.broadcasted_iota(jnp.int32, (M, in_channels), 1)
        h = (tok == cls).astype(jnp.float32)                         # one-hot (M, C_in)
    else:
        h = x_ref[...].astype(jnp.float32)                           # (M, C_in)

    def conv_relu(h, w_ref, b_ref):
        # h: (M, C); w_ref: (K*C, C_out); b_ref: (1, C_out)
        m, c = h.shape
        # 8 zero rows keep the shifted slices in-bounds (K-1 <= 8) and sublane-aligned.
        hp = jnp.concatenate([h, jnp.zeros((8, c), jnp.float32)], axis=0)
        # im2col: concat the K shifted views along the contraction dim -> one matmul.
        cols = jnp.concatenate([hp[k:k + m, :] for k in range(K)], axis=1)  # (M, K*C)
        z = jnp.dot(cols, w_ref[...], preferred_element_type=jnp.float32) + b_ref[...]
        return jnp.maximum(z, 0.0)

    h = conv_relu(h, w1_ref, b1_ref)
    h = conv_relu(h, w2_ref, b2_ref)
    h = conv_relu(h, w3_ref, b3_ref)                                 # (M, C3)

    c3 = h.shape[-1]
    h3 = h.reshape(TB, seq_len, c3)                                  # seq_len % 8 == 0
    pos = lax.broadcasted_iota(jnp.int32, h3.shape, 1)
    # rows >= valid_len are boundary/padding garbage -> exclude from the global max
    feat = jnp.max(jnp.where(pos < valid_len, h3, -jnp.inf), axis=1)  # (TB, C3)

    z = jnp.maximum(
        jnp.dot(feat, fw1_ref[...], preferred_element_type=jnp.float32) + fb1_ref[...],
        0.0)
    out = jnp.dot(z, fw2_ref[...], preferred_element_type=jnp.float32) + fb2_ref[...]
    out_ref[...] = out.astype(out_ref.dtype)                         # (TB, 128) lane-dense


def init_params(key, in_channels, num_filters, kernel_size, fc_hidden_size, num_classes):
    """Deterministic synthetic parameters (kernel-friendly layouts)."""
    c1, c2, c3 = num_filters // 4, num_filters // 2, num_filters
    ks = jax.random.split(key, 10)
    f32 = jnp.float32

    def w(k, shape, scale=0.1):
        return (scale * jax.random.normal(k, shape)).astype(f32)

    return {
        # conv weights stored as (K, C_in, C_out); biases as (1, C_out)
        "w1": w(ks[0], (kernel_size, in_channels, c1)), "b1": w(ks[1], (1, c1)),
        "w2": w(ks[2], (kernel_size, c1, c2)),          "b2": w(ks[3], (1, c2)),
        "w3": w(ks[4], (kernel_size, c2, c3)),          "b3": w(ks[5], (1, c3)),
        # fc weights stored as (in, out); biases as (1, out)
        "fw1": w(ks[6], (c3, fc_hidden_size)),          "fb1": w(ks[7], (1, fc_hidden_size)),
        "fw2": w(ks[8], (fc_hidden_size, num_classes)), "fb2": w(ks[9], (1, num_classes)),
    }


@functools.partial(jax.jit, static_argnames=("in_channels",))
def sequence_classifier_forward(inp, params, *, in_channels):
    token_input = (inp.ndim == 2)          # encode(): one-hot branch for int tokens
    if token_input:
        B, L = inp.shape
        C_in = in_channels
    else:
        B, L, C_in = inp.shape

    K = params["w1"].shape[0]
    num_classes = params["fw2"].shape[1]
    valid_len = L - 3 * (K - 1)            # final VALID-conv output length
    assert valid_len >= 1, "sequence too short for three VALID convolutions"

    # Batch tile: multiple of 8 sublanes, capped at 128; amortizes per-step
    # pipeline overhead and fills MXU rows while keeping the per-step VMEM
    # working set small (safe for v7x's 64 MiB VMEM; >=2 grid steps for large B
    # so both v7x TensorCores get work via "parallel" semantics).
    TB = min(128, _round_up(B, 8))
    B_pad = _round_up(B, TB)
    L_pad = _round_up(L, 8)                # keep working seq length 8-sublane aligned

    if token_input:
        x = inp.astype(jnp.int32)
        x = jnp.pad(x, ((0, B_pad - B), (0, L_pad - L)))
        x = x.reshape(B_pad * L_pad, 1)
        x_spec = pl.BlockSpec((TB * L_pad, 1), lambda i: (i, 0))
    else:
        x = inp.astype(jnp.float32)
        x = jnp.pad(x, ((0, B_pad - B), (0, L_pad - L), (0, 0)))
        x = x.reshape(B_pad * L_pad, C_in)
        x_spec = pl.BlockSpec((TB * L_pad, C_in), lambda i: (i, 0))

    # im2col-fused conv weights: (K, C_in, C_out) -> (K*C_in, C_out)
    w1 = params["w1"].reshape(-1, params["w1"].shape[-1])
    w2 = params["w2"].reshape(-1, params["w2"].shape[-1])
    w3 = params["w3"].reshape(-1, params["w3"].shape[-1])
    b1, b2, b3 = params["b1"], params["b2"], params["b3"]
    fw1, fb1 = params["fw1"], params["fb1"]

    # Lane-dense output: pad the classifier head to 128 output lanes.
    NC_PAD = _round_up(num_classes, 128)
    fw2 = jnp.pad(params["fw2"], ((0, 0), (0, NC_PAD - num_classes)))
    fb2 = jnp.pad(params["fb2"], ((0, 0), (0, NC_PAD - num_classes)))

    full = lambda a: pl.BlockSpec(a.shape, lambda i: (0,) * a.ndim)

    kernel = functools.partial(
        _seq_classifier_kernel, kernel_size=K, in_channels=C_in,
        seq_len=L_pad, valid_len=valid_len, token_input=token_input)

    out = pl.pallas_call(
        kernel,
        out_shape=jax.ShapeDtypeStruct((B_pad, NC_PAD), jnp.float32),
        grid=(B_pad // TB,),
        in_specs=[x_spec,
                  full(w1), full(b1), full(w2), full(b2), full(w3), full(b3),
                  full(fw1), full(fb1), full(fw2), full(fb2)],
        out_specs=pl.BlockSpec((TB, NC_PAD), lambda i: (i, 0)),
        compiler_params=pltpu.CompilerParams(dimension_semantics=("parallel",)),
    )(x, w1, b1, w2, b2, w3, b3, fw1, fb1, fw2, fb2)

    return out[:B, :num_classes]


def reference_forward(inp, params, in_channels):
    """Pure-JAX reference mirroring the PyTorch module (NCL conv path)."""
    if inp.ndim == 2:
        inp = jax.nn.one_hot(inp, in_channels, dtype=jnp.float32)
    x = jnp.transpose(inp.astype(jnp.float32), (0, 2, 1))    # (B, C, L) == NCL
    for wk, bk in (("w1", "b1"), ("w2", "b2"), ("w3", "b3")):
        w = jnp.transpose(params[wk], (2, 1, 0))              # (C_out, C_in, K)
        x = lax.conv_general_dilated(x, w, window_strides=(1,), padding="VALID",
                                     dimension_numbers=("NCH", "OIH", "NCH"))
        x = jnp.maximum(x + params[bk].reshape(1, -1, 1), 0.0)
    feat = jnp.max(x, axis=-1)                                # (B, num_filters)
    z = jnp.maximum(feat @ params["fw1"] + params["fb1"], 0.0)
    return z @ params["fw2"] + params["fb2"]


if __name__ == "__main__":
    in_channels = 4
    num_filters = 32
    kernel_size = 3
    fc_hidden_size = 32
    num_classes = 5
    batch, seq_len = 2, 16

    key = jax.random.PRNGKey(0)
    k_params, k_tok, k_dense = jax.random.split(key, 3)
    params = init_params(k_params, in_channels, num_filters, kernel_size,
                         fc_hidden_size, num_classes)

    # Path 1: integer token sequences (exercises the one-hot branch of encode()).
    tokens = jax.random.randint(k_tok, (batch, seq_len), 0, in_channels, dtype=jnp.int32)
    out_tok = jax.block_until_ready(
        sequence_classifier_forward(tokens, params, in_channels=in_channels))
    ref_tok = reference_forward(tokens, params, in_channels)
    assert out_tok.shape == (batch, num_classes)
    np.testing.assert_allclose(np.asarray(out_tok), np.asarray(ref_tok),
                               rtol=1e-4, atol=1e-4)

    # Path 2: dense (B, L, C) float input.
    dense = jax.random.normal(k_dense, (batch, seq_len, in_channels), dtype=jnp.float32)
    out_dense = jax.block_until_ready(
        sequence_classifier_forward(dense, params, in_channels=in_channels))
    ref_dense = reference_forward(dense, params, in_channels)
    assert out_dense.shape == (batch, num_classes)
    np.testing.assert_allclose(np.asarray(out_dense), np.asarray(ref_dense),
                               rtol=1e-4, atol=1e-4)

    print("KERNEL_OK")
</pallas_src>

<mosaic_0001>
module attributes {stable_mosaic.version = 11 : i64} {
  func.func @_seq_classifier_kernel(%arg0: i32, %arg1: memref<128x1xi32, #tpu.memory_space<vmem>>, %arg2: memref<12x8xf32, #tpu.memory_space<vmem>>, %arg3: memref<1x8xf32, #tpu.memory_space<vmem>>, %arg4: memref<24x16xf32, #tpu.memory_space<vmem>>, %arg5: memref<1x16xf32, #tpu.memory_space<vmem>>, %arg6: memref<48x32xf32, #tpu.memory_space<vmem>>, %arg7: memref<1x32xf32, #tpu.memory_space<vmem>>, %arg8: memref<32x32xf32, #tpu.memory_space<vmem>>, %arg9: memref<1x32xf32, #tpu.memory_space<vmem>>, %arg10: memref<32x128xf32, #tpu.memory_space<vmem>>, %arg11: memref<1x128xf32, #tpu.memory_space<vmem>>, %arg12: memref<8x128xf32, #tpu.memory_space<vmem>>) attributes {dimension_semantics = [#tpu.dimension_semantics<parallel>], iteration_bounds = array<i64: 1>, scalar_prefetch = 0 : i64, scratch_operands = 0 : i64, tpu.core_type = #tpu.core_type<tc>, window_params = [{transform_indices = @transform_0, window_bounds = array<i64: 128, 1>}, {pipeline_mode = #tpu.pipeline_mode<synchronous>, transform_indices = @transform_1, window_bounds = array<i64: 12, 8>}, {pipeline_mode = #tpu.pipeline_mode<synchronous>, transform_indices = @transform_2, window_bounds = array<i64: 1, 8>}, {pipeline_mode = #tpu.pipeline_mode<synchronous>, transform_indices = @transform_3, window_bounds = array<i64: 24, 16>}, {pipeline_mode = #tpu.pipeline_mode<synchronous>, transform_indices = @transform_4, window_bounds = array<i64: 1, 16>}, {pipeline_mode = #tpu.pipeline_mode<synchronous>, transform_indices = @transform_5, window_bounds = array<i64: 48, 32>}, {pipeline_mode = #tpu.pipeline_mode<synchronous>, transform_indices = @transform_6, window_bounds = array<i64: 1, 32>}, {pipeline_mode = #tpu.pipeline_mode<synchronous>, transform_indices = @transform_7, window_bounds = array<i64: 32, 32>}, {pipeline_mode = #tpu.pipeline_mode<synchronous>, transform_indices = @transform_8, window_bounds = array<i64: 1, 32>}, {pipeline_mode = #tpu.pipeline_mode<synchronous>, transform_indices = @transform_9, window_bounds = array<i64: 32, 128>}, {pipeline_mode = #tpu.pipeline_mode<synchronous>, transform_indices = @transform_10, window_bounds = array<i64: 1, 128>}, {transform_indices = @transform_11, window_bounds = array<i64: 8, 128>}]} {
    %c0 = arith.constant 0 : index
    %c0_0 = arith.constant 0 : index
    %0 = vector.load %arg1[%c0, %c0_0] : memref<128x1xi32, #tpu.memory_space<vmem>>, vector<128x1xi32>
    %1 = tpu.iota {dimensions = array<i32: 1>} : vector<128x4xi32>
    %2 = vector.broadcast %0 : vector<128x1xi32> to vector<128x4xi32>
    %3 = arith.cmpi eq, %2, %1 : vector<128x4xi32>
    %4 = arith.extui %3 : vector<128x4xi1> to vector<128x4xi32>
    %5 = arith.sitofp %4 : vector<128x4xi32> to vector<128x4xf32>
    %cst = arith.constant 0.000000e+00 : f32
    %6 = vector.broadcast %cst : f32 to vector<8x4xf32>
    %7 = tpu.concatenate %5, %6 in 0 : vector<128x4xf32>, vector<8x4xf32> -> vector<136x4xf32>
    %8 = vector.extract_strided_slice %7 {offsets = [0, 0], sizes = [128, 4], strides = [1, 1]} : vector<136x4xf32> to vector<128x4xf32>
    %9 = vector.extract_strided_slice %7 {offsets = [1, 0], sizes = [128, 4], strides = [1, 1]} : vector<136x4xf32> to vector<128x4xf32>
    %10 = vector.extract_strided_slice %7 {offsets = [2, 0], sizes = [128, 4], strides = [1, 1]} : vector<136x4xf32> to vector<128x4xf32>
    %11 = tpu.concatenate %8, %9, %10 in 1 : vector<128x4xf32>, vector<128x4xf32>, vector<128x4xf32> -> vector<128x12xf32>
    %c0_1 = arith.constant 0 : index
    %c0_2 = arith.constant 0 : index
    %12 = vector.load %arg2[%c0_1, %c0_2] : memref<12x8xf32, #tpu.memory_space<vmem>>, vector<12x8xf32>
    %cst_3 = arith.constant dense<0.000000e+00> : vector<128x8xf32>
    %13 = tpu.matmul %11, %12, %cst_3 {dimension_numbers = #tpu.dot_dimension_numbers<[1], [0], [0], [1], [0, 0, 1, 1], [], []>} : vector<128x12xf32>, vector<12x8xf32>, vector<128x8xf32> -> vector<128x8xf32>
    %c0_4 = arith.constant 0 : index
    %c0_5 = arith.constant 0 : index
    %14 = vector.load %arg3[%c0_4, %c0_5] : memref<1x8xf32, #tpu.memory_space<vmem>>, vector<1x8xf32>
    %15 = vector.broadcast %14 : vector<1x8xf32> to vector<128x8xf32>
    %16 = arith.addf %13, %15 : vector<128x8xf32>
    %cst_6 = arith.constant 0.000000e+00 : f32
    %17 = vector.broadcast %cst_6 : f32 to vector<128x8xf32>
    %18 = arith.maximumf %16, %17 : vector<128x8xf32>
    %cst_7 = arith.constant 0.000000e+00 : f32
    %19 = vector.broadcast %cst_7 : f32 to vector<8x8xf32>
    %20 = tpu.concatenate %18, %19 in 0 : vector<128x8xf32>, vector<8x8xf32> -> vector<136x8xf32>
    %21 = vector.extract_strided_slice %20 {offsets = [0, 0], sizes = [128, 8], strides = [1, 1]} : vector<136x8xf32> to vector<128x8xf32>
    %22 = vector.extract_strided_slice %20 {offsets = [1, 0], sizes = [128, 8], strides = [1, 1]} : vector<136x8xf32> to vector<128x8xf32>
    %23 = vector.extract_strided_slice %20 {offsets = [2, 0], sizes = [128, 8], strides = [1, 1]} : vector<136x8xf32> to vector<128x8xf32>
    %24 = tpu.concatenate %21, %22, %23 in 1 : vector<128x8xf32>, vector<128x8xf32>, vector<128x8xf32> -> vector<128x24xf32>
    %c0_8 = arith.constant 0 : index
    %c0_9 = arith.constant 0 : index
    %25 = vector.load %arg4[%c0_8, %c0_9] : memref<24x16xf32, #tpu.memory_space<vmem>>, vector<24x16xf32>
    %cst_10 = arith.constant dense<0.000000e+00> : vector<128x16xf32>
    %26 = tpu.matmul %24, %25, %cst_10 {dimension_numbers = #tpu.dot_dimension_numbers<[1], [0], [0], [1], [0, 0, 1, 1], [], []>} : vector<128x24xf32>, vector<24x16xf32>, vector<128x16xf32> -> vector<128x16xf32>
    %c0_11 = arith.constant 0 : index
    %c0_12 = arith.constant 0 : index
    %27 = vector.load %arg5[%c0_11, %c0_12] : memref<1x16xf32, #tpu.memory_space<vmem>>, vector<1x16xf32>
    %28 = vector.broadcast %27 : vector<1x16xf32> to vector<128x16xf32>
    %29 = arith.addf %26, %28 : vector<128x16xf32>
    %cst_13 = arith.constant 0.000000e+00 : f32
    %30 = vector.broadcast %cst_13 : f32 to vector<128x16xf32>
    %31 = arith.maximumf %29, %30 : vector<128x16xf32>
    %cst_14 = arith.constant 0.000000e+00 : f32
    %32 = vector.broadcast %cst_14 : f32 to vector<8x16xf32>
    %33 = tpu.concatenate %31, %32 in 0 : vector<128x16xf32>, vector<8x16xf32> -> vector<136x16xf32>
    %34 = vector.extract_strided_slice %33 {offsets = [0, 0], sizes = [128, 16], strides = [1, 1]} : vector<136x16xf32> to vector<128x16xf32>
    %35 = vector.extract_strided_slice %33 {offsets = [1, 0], sizes = [128, 16], strides = [1, 1]} : vector<136x16xf32> to vector<128x16xf32>
    %36 = vector.extract_strided_slice %33 {offsets = [2, 0], sizes = [128, 16], strides = [1, 1]} : vector<136x16xf32> to vector<128x16xf32>
    %37 = tpu.concatenate %34, %35, %36 in 1 : vector<128x16xf32>, vector<128x16xf32>, vector<128x16xf32> -> vector<128x48xf32>
    %c0_15 = arith.constant 0 : index
    %c0_16 = arith.constant 0 : index
    %38 = vector.load %arg6[%c0_15, %c0_16] : memref<48x32xf32, #tpu.memory_space<vmem>>, vector<48x32xf32>
    %cst_17 = arith.constant dense<0.000000e+00> : vector<128x32xf32>
    %39 = tpu.matmul %37, %38, %cst_17 {dimension_numbers = #tpu.dot_dimension_numbers<[1], [0], [0], [1], [0, 0, 1, 1], [], []>} : vector<128x48xf32>, vector<48x32xf32>, vector<128x32xf32> -> vector<128x32xf32>
    %c0_18 = arith.constant 0 : index
    %c0_19 = arith.constant 0 : index
    %40 = vector.load %arg7[%c0_18, %c0_19] : memref<1x32xf32, #tpu.memory_space<vmem>>, vector<1x32xf32>
    %41 = vector.broadcast %40 : vector<1x32xf32> to vector<128x32xf32>
    %42 = arith.addf %39, %41 : vector<128x32xf32>
    %cst_20 = arith.constant 0.000000e+00 : f32
    %43 = vector.broadcast %cst_20 : f32 to vector<128x32xf32>
    %44 = arith.maximumf %42, %43 : vector<128x32xf32>
    %45 = vector.shape_cast %44 : vector<128x32xf32> to vector<8x16x32xf32>
    %46 = tpu.iota {dimensions = array<i32: 1>} : vector<8x16x32xi32>
    %c10_i32 = arith.constant 10 : i32
    %47 = vector.broadcast %c10_i32 : i32 to vector<8x16x32xi32>
    %48 = arith.cmpi slt, %46, %47 : vector<8x16x32xi32>
    %cst_21 = arith.constant 0xFF800000 : f32
    %49 = vector.broadcast %cst_21 : f32 to vector<8x16x32xf32>
    %50 = arith.select %48, %45, %49 : vector<8x16x32xi1>, vector<8x16x32xf32>
    %cst_22 = arith.constant dense<0xFF800000> : vector<8x32xf32>
    %51 = vector.multi_reduction <maximumf>, %50, %cst_22 [1] : vector<8x16x32xf32> to vector<8x32xf32>
    %c0_23 = arith.constant 0 : index
    %c0_24 = arith.constant 0 : index
    %52 = vector.load %arg8[%c0_23, %c0_24] : memref<32x32xf32, #tpu.memory_space<vmem>>, vector<32x32xf32>
    %cst_25 = arith.constant dense<0.000000e+00> : vector<8x32xf32>
    %53 = tpu.matmul %51, %52, %cst_25 {dimension_numbers = #tpu.dot_dimension_numbers<[1], [0], [0], [1], [0, 0, 1, 1], [], []>} : vector<8x32xf32>, vector<32x32xf32>, vector<8x32xf32> -> vector<8x32xf32>
    %c0_26 = arith.constant 0 : index
    %c0_27 = arith.constant 0 : index
    %54 = vector.load %arg9[%c0_26, %c0_27] : memref<1x32xf32, #tpu.memory_space<vmem>>, vector<1x32xf32>
    %55 = vector.broadcast %54 : vector<1x32xf32> to vector<8x32xf32>
    %56 = arith.addf %53, %55 : vector<8x32xf32>
    %cst_28 = arith.constant 0.000000e+00 : f32
    %57 = vector.broadcast %cst_28 : f32 to vector<8x32xf32>
    %58 = arith.maximumf %56, %57 : vector<8x32xf32>
    %c0_29 = arith.constant 0 : index
    %c0_30 = arith.constant 0 : index
    %59 = vector.load %arg10[%c0_29, %c0_30] : memref<32x128xf32, #tpu.memory_space<vmem>>, vector<32x128xf32>
    %cst_31 = arith.constant dense<0.000000e+00> : vector<8x128xf32>
    %60 = tpu.matmul %58, %59, %cst_31 {dimension_numbers = #tpu.dot_dimension_numbers<[1], [0], [0], [1], [0, 0, 1, 1], [], []>} : vector<8x32xf32>, vector<32x128xf32>, vector<8x128xf32> -> vector<8x128xf32>
    %c0_32 = arith.constant 0 : index
    %c0_33 = arith.constant 0 : index
    %61 = vector.load %arg11[%c0_32, %c0_33] : memref<1x128xf32, #tpu.memory_space<vmem>>, vector<1x128xf32>
    %62 = vector.broadcast %61 : vector<1x128xf32> to vector<8x128xf32>
    %63 = arith.addf %60, %62 : vector<8x128xf32>
    %c0_34 = arith.constant 0 : index
    %c0_35 = arith.constant 0 : index
    %64 = vector.load %arg12[%c0_34, %c0_35] : memref<8x128xf32, #tpu.memory_space<vmem>>, vector<8x128xf32>
    tpu.vector_store %arg12[%c0_34, %c0_35], %63 {strides = array<i32>} : memref<8x128xf32, #tpu.memory_space<vmem>>, vector<8x128xf32>,
    return
  }
  func.func @transform_0(%arg0: i32) -> (i32, i32) {
    %c0_i32 = arith.constant 0 : i32
    %c0_i32_0 = arith.constant 0 : i32
    return %arg0, %c0_i32 : i32, i32
  }
  func.func @transform_1(%arg0: i32) -> (i32, i32) {
    %c0_i32 = arith.constant 0 : i32
    %c0_i32_0 = arith.constant 0 : i32
    %c0_i32_1 = arith.constant 0 : i32
    return %c0_i32, %c0_i32_0 : i32, i32
  }
  func.func @transform_2(%arg0: i32) -> (i32, i32) {
    %c0_i32 = arith.constant 0 : i32
    %c0_i32_0 = arith.constant 0 : i32
    %c0_i32_1 = arith.constant 0 : i32
    return %c0_i32, %c0_i32_0 : i32, i32
  }
  func.func @transform_3(%arg0: i32) -> (i32, i32) {
    %c0_i32 = arith.constant 0 : i32
    %c0_i32_0 = arith.constant 0 : i32
    %c0_i32_1 = arith.constant 0 : i32
    return %c0_i32, %c0_i32_0 : i32, i32
  }
  func.func @transform_4(%arg0: i32) -> (i32, i32) {
    %c0_i32 = arith.constant 0 : i32
    %c0_i32_0 = arith.constant 0 : i32
    %c0_i32_1 = arith.constant 0 : i32
    return %c0_i32, %c0_i32_0 : i32, i32
  }
  func.func @transform_5(%arg0: i32) -> (i32, i32) {
    %c0_i32 = arith.constant 0 : i32
    %c0_i32_0 = arith.constant 0 : i32
    %c0_i32_1 = arith.constant 0 : i32
    return %c0_i32, %c0_i32_0 : i32, i32
  }
  func.func @transform_6(%arg0: i32) -> (i32, i32) {
    %c0_i32 = arith.constant 0 : i32
    %c0_i32_0 = arith.constant 0 : i32
    %c0_i32_1 = arith.constant 0 : i32
    return %c0_i32, %c0_i32_0 : i32, i32
  }
  func.func @transform_7(%arg0: i32) -> (i32, i32) {
    %c0_i32 = arith.constant 0 : i32
    %c0_i32_0 = arith.constant 0 : i32
    %c0_i32_1 = arith.constant 0 : i32
    return %c0_i32, %c0_i32_0 : i32, i32
  }
  func.func @transform_8(%arg0: i32) -> (i32, i32) {
    %c0_i32 = arith.constant 0 : i32
    %c0_i32_0 = arith.constant 0 : i32
    %c0_i32_1 = arith.constant 0 : i32
    return %c0_i32, %c0_i32_0 : i32, i32
  }
  func.func @transform_9(%arg0: i32) -> (i32, i32) {
    %c0_i32 = arith.constant 0 : i32
    %c0_i32_0 = arith.constant 0 : i32
    %c0_i32_1 = arith.constant 0 : i32
    return %c0_i32, %c0_i32_0 : i32, i32
  }
  func.func @transform_10(%arg0: i32) -> (i32, i32) {
    %c0_i32 = arith.constant 0 : i32
    %c0_i32_0 = arith.constant 0 : i32
    %c0_i32_1 = arith.constant 0 : i32
    return %c0_i32, %c0_i32_0 : i32, i32
  }
  func.func @transform_11(%arg0: i32) -> (i32, i32) {
    %c0_i32 = arith.constant 0 : i32
    %c0_i32_0 = arith.constant 0 : i32
    return %arg0, %c0_i32 : i32, i32
  }
}

</mosaic_0001>

<llo_original>
// kernel: sequence_classifier_forward.1
$region0: #{sequence_classifier_forward.1}
  #allocation0 [shape = 'u32[]', space=smem, size = 0x4, offset = 0x4, fixed_abs, tag = 'smem constant byte address 0x4 - core index']
  #allocation1 [shape = 'u32[144,128]{1,0:T(1,128)}', space=vmem, size = 0x12000, scoped, tag = 'internal scratch']
  %s0 = inlined_call_operand.vmem [shape: s32[128,1], index: 0, kind: input, shape index: {}]
  %s1 = inlined_call_operand.vmem [shape: f32[12,8], index: 1, kind: input, shape index: {}]
  %s2 = inlined_call_operand.vmem [shape: f32[1,8], index: 2, kind: input, shape index: {}]
  %s3 = inlined_call_operand.vmem [shape: f32[24,16], index: 3, kind: input, shape index: {}]
  %s4 = inlined_call_operand.vmem [shape: f32[1,16], index: 4, kind: input, shape index: {}]
  %s5 = inlined_call_operand.vmem [shape: f32[48,32], index: 5, kind: input, shape index: {}]
  %s6 = inlined_call_operand.vmem [shape: f32[1,32], index: 6, kind: input, shape index: {}]
  %s7 = inlined_call_operand.vmem [shape: f32[32,32], index: 7, kind: input, shape index: {}]
  %s8 = inlined_call_operand.vmem [shape: f32[1,32], index: 8, kind: input, shape index: {}]
  %s9 = inlined_call_operand.vmem [shape: f32[32,128], index: 9, kind: input, shape index: {}]
  %s10 = inlined_call_operand.vmem [shape: f32[1,128], index: 10, kind: input, shape index: {}]
  %s11 = inlined_call_operand.vmem [shape: f32[8,128], index: 11, kind: output, shape index: {}]
  %s12 = sld [smem:[#allocation0]]
  $region54: #{sequence_classifier_forward.1} parent=0
    _
  %s14 = ssub.s32 1, %s12
  %s15 = scalar_select 0, %s14, %s12
  // Predicated region
  $region2: #{sequence_classifier_forward.1} parent=0 // pred_check
    _
  $region3: #{sequence_classifier_forward.1} parent=0 // pred_check_branch
    %17 = sbr.rel (0) target = $region5
  $region4: #{sequence_classifier_forward.1} parent=0 // pred_region
    _
  $region5: #{sequence_classifier_forward.1} parent=0 // pred_fallthru
    _
  // Predicated region
  $region6: #{sequence_classifier_forward.1} parent=0 // pred_check
    _
  $region7: #{sequence_classifier_forward.1} parent=0 // pred_check_branch
    %19 = sbr.rel (0) target = $region9
  $region8: #{sequence_classifier_forward.1} parent=0 // pred_region
    _
  $region9: #{sequence_classifier_forward.1} parent=0 // pred_fallthru
    _
  // Predicated region
  $region10: #{sequence_classifier_forward.1} parent=0 // pred_check
    _
  $region11: #{sequence_classifier_forward.1} parent=0 // pred_check_branch
    %21 = sbr.rel (0) target = $region13
  $region12: #{sequence_classifier_forward.1} parent=0 // pred_region
    _
  $region13: #{sequence_classifier_forward.1} parent=0 // pred_fallthru
    _
  // Predicated region
  $region14: #{sequence_classifier_forward.1} parent=0 // pred_check
    _
  $region15: #{sequence_classifier_forward.1} parent=0 // pred_check_branch
    %23 = sbr.rel (0) target = $region17
  $region16: #{sequence_classifier_forward.1} parent=0 // pred_region
    _
  $region17: #{sequence_classifier_forward.1} parent=0 // pred_fallthru
    _
  // Predicated region
  $region18: #{sequence_classifier_forward.1} parent=0 // pred_check
    _
  $region19: #{sequence_classifier_forward.1} parent=0 // pred_check_branch
    %25 = sbr.rel (0) target = $region21
  $region20: #{sequence_classifier_forward.1} parent=0 // pred_region
    _
  $region21: #{sequence_classifier_forward.1} parent=0 // pred_fallthru
    _
  // Predicated region
  $region22: #{sequence_classifier_forward.1} parent=0 // pred_check
    _
  $region23: #{sequence_classifier_forward.1} parent=0 // pred_check_branch
    %27 = sbr.rel (0) target = $region25
  $region24: #{sequence_classifier_forward.1} parent=0 // pred_region
    _
  $region25: #{sequence_classifier_forward.1} parent=0 // pred_fallthru
    _
  // Predicated region
  $region26: #{sequence_classifier_forward.1} parent=0 // pred_check
    _
  $region27: #{sequence_classifier_forward.1} parent=0 // pred_check_branch
    %29 = sbr.rel (0) target = $region29
  $region28: #{sequence_classifier_forward.1} parent=0 // pred_region
    _
  $region29: #{sequence_classifier_forward.1} parent=0 // pred_fallthru
    _
  // Predicated region
  $region30: #{sequence_classifier_forward.1} parent=0 // pred_check
    _
  $region31: #{sequence_classifier_forward.1} parent=0 // pred_check_branch
    %31 = sbr.rel (0) target = $region33
  $region32: #{sequence_classifier_forward.1} parent=0 // pred_region
    _
  $region33: #{sequence_classifier_forward.1} parent=0 // pred_fallthru
    _
  // Predicated region
  $region34: #{sequence_classifier_forward.1} parent=0 // pred_check
    _
  $region35: #{sequence_classifier_forward.1} parent=0 // pred_check_branch
    %33 = sbr.rel (0) target = $region37
  $region36: #{sequence_classifier_forward.1} parent=0 // pred_region
    _
  $region37: #{sequence_classifier_forward.1} parent=0 // pred_fallthru
    _
  // Predicated region
  $region38: #{sequence_classifier_forward.1} parent=0 // pred_check
    _
  $region39: #{sequence_classifier_forward.1} parent=0 // pred_check_branch
    %35 = sbr.rel (0) target = $region41
  $region40: #{sequence_classifier_forward.1} parent=0 // pred_region
    _
  $region41: #{sequence_classifier_forward.1} parent=0 // pred_fallthru
    _
  // Predicated region
  $region42: #{sequence_classifier_forward.1} parent=0 // pred_check
    _
  $region43: #{sequence_classifier_forward.1} parent=0 // pred_check_branch
    %37 = sbr.rel (0) target = $region45
  $region44: #{sequence_classifier_forward.1} parent=0 // pred_region
    _
  $region45: #{sequence_classifier_forward.1} parent=0 // pred_fallthru
    _
  %v38 = vld [vmem:[%s0] sm:$0xff]
  %v39 = vld [vmem:[%s0 + $0x8] sm:$0xff]
  %v40 = vld [vmem:[%s0 + $0x10] sm:$0xff]
  %v41 = vld [vmem:[%s0 + $0x18] sm:$0xff]
  %v42 = vld [vmem:[%s0 + $0x20] sm:$0xff]
  %v43 = vld [vmem:[%s0 + $0x28] sm:$0xff]
  %v44 = vld [vmem:[%s0 + $0x30] sm:$0xff]
  %v45 = vld [vmem:[%s0 + $0x38] sm:$0xff]
  %v46 = vld [vmem:[%s0 + $0x40] sm:$0xff]
  %v47 = vld [vmem:[%s0 + $0x48] sm:$0xff]
  %v48 = vld [vmem:[%s0 + $0x50] sm:$0xff]
  %v49 = vld [vmem:[%s0 + $0x58] sm:$0xff]
  %v50 = vld [vmem:[%s0 + $0x60] sm:$0xff]
  %v51 = vld [vmem:[%s0 + $0x68] sm:$0xff]
  %v52 = vld [vmem:[%s0 + $0x70] sm:$0xff]
  %v53 = vld [vmem:[%s0 + $0x78] sm:$0xff]
  %v54 = vlaneseq
  %v55 = vand.u32 %v54, 127
  %56 = vset.pattern.permute.xlu0 0
  %57 = vperm.xlu0 %56, %v38
  %v58 = vpop.permute.xlu0 %57
  %59 = vset.pattern.permute.xlu0 0
  %60 = vperm.xlu0 %59, %v39
  %v61 = vpop.permute.xlu0 %60
  %62 = vset.pattern.permute.xlu0 0
  %63 = vperm.xlu0 %62, %v40
  %v64 = vpop.permute.xlu0 %63
  %65 = vset.pattern.permute.xlu0 0
  %66 = vperm.xlu0 %65, %v41
  %v67 = vpop.permute.xlu0 %66
  %68 = vset.pattern.permute.xlu0 0
  %69 = vperm.xlu0 %68, %v42
  %v70 = vpop.permute.xlu0 %69
  %71 = vset.pattern.permute.xlu0 0
  %72 = vperm.xlu0 %71, %v43
  %v73 = vpop.permute.xlu0 %72
  %74 = vset.pattern.permute.xlu0 0
  %75 = vperm.xlu0 %74, %v44
  %v76 = vpop.permute.xlu0 %75
  %77 = vset.pattern.permute.xlu0 0
  %78 = vperm.xlu0 %77, %v45
  %v79 = vpop.permute.xlu0 %78
  %80 = vset.pattern.permute.xlu0 0
  %81 = vperm.xlu0 %80, %v46
  %v82 = vpop.permute.xlu0 %81
  %83 = vset.pattern.permute.xlu0 0
  %84 = vperm.xlu0 %83, %v47
  %v85 = vpop.permute.xlu0 %84
  %86 = vset.pattern.permute.xlu0 0
  %87 = vperm.xlu0 %86, %v48
  %v88 = vpop.permute.xlu0 %87
  %89 = vset.pattern.permute.xlu0 0
  %90 = vperm.xlu0 %89, %v49
  %v91 = vpop.permute.xlu0 %90
  %92 = vset.pattern.permute.xlu0 0
  %93 = vperm.xlu0 %92, %v50
  %v94 = vpop.permute.xlu0 %93
  %95 = vset.pattern.permute.xlu0 0
  %96 = vperm.xlu0 %95, %v51
  %v97 = vpop.permute.xlu0 %96
  %98 = vset.pattern.permute.xlu0 0
  %99 = vperm.xlu0 %98, %v52
  %v100 = vpop.permute.xlu0 %99
  %101 = vset.pattern.permute.xlu0 0
  %102 = vperm.xlu0 %101, %v53
  %v103 = vpop.permute.xlu0 %102
  %vm104 = vcmp.eq.s32.totalorder %v58, %v55
  %vm105 = vcmp.eq.s32.totalorder %v61, %v55
  %vm106 = vcmp.eq.s32.totalorder %v64, %v55
  %vm107 = vcmp.eq.s32.totalorder %v67, %v55
  %vm108 = vcmp.eq.s32.totalorder %v70, %v55
  %vm109 = vcmp.eq.s32.totalorder %v73, %v55
  %vm110 = vcmp.eq.s32.totalorder %v76, %v55
  %vm111 = vcmp.eq.s32.totalorder %v79, %v55
  %vm112 = vcmp.eq.s32.totalorder %v82, %v55
  %vm113 = vcmp.eq.s32.totalorder %v85, %v55
  %vm114 = vcmp.eq.s32.totalorder %v88, %v55
  %vm115 = vcmp.eq.s32.totalorder %v91, %v55
  %vm116 = vcmp.eq.s32.totalorder %v94, %v55
  %vm117 = vcmp.eq.s32.totalorder %v97, %v55
  %vm118 = vcmp.eq.s32.totalorder %v100, %v55
  %vm119 = vcmp.eq.s32.totalorder %v103, %v55
  %v120 = vsel %vm104, 1, 0
  %v121 = vsel %vm105, 1, 0
  %v122 = vsel %vm106, 1, 0
  %v123 = vsel %vm107, 1, 0
  %v124 = vsel %vm108, 1, 0
  %v125 = vsel %vm109, 1, 0
  %v126 = vsel %vm110, 1, 0
  %v127 = vsel %vm111, 1, 0
  %v128 = vsel %vm112, 1, 0
  %v129 = vsel %vm113, 1, 0
  %v130 = vsel %vm114, 1, 0
  %v131 = vsel %vm115, 1, 0
  %v132 = vsel %vm116, 1, 0
  %v133 = vsel %vm117, 1, 0
  %v134 = vsel %vm118, 1, 0
  %v135 = vsel %vm119, 1, 0
  %v136 = vcvt.s32.f32 %v120
  %v137 = vcvt.s32.f32 %v121
  %v138 = vcvt.s32.f32 %v122
  %v139 = vcvt.s32.f32 %v123
  %v140 = vcvt.s32.f32 %v124
  %v141 = vcvt.s32.f32 %v125
  %v142 = vcvt.s32.f32 %v126
  %v143 = vcvt.s32.f32 %v127
  %v144 = vcvt.s32.f32 %v128
  %v145 = vcvt.s32.f32 %v129
  %v146 = vcvt.s32.f32 %v130
  %v147 = vcvt.s32.f32 %v131
  %v148 = vcvt.s32.f32 %v132
  %v149 = vcvt.s32.f32 %v133
  %v150 = vcvt.s32.f32 %v134
  %v151 = vcvt.s32.f32 %v135
  %vm169 = vcmask 1046528
  %v170 = vrot.slane %v136, 1
  %v171 = vrot.slane %v137, 1
  %v172 = vsel %vm169, %v170, %v171
  %v173 = vrot.slane %v138, 1
  %v174 = vsel %vm169, %v171, %v173
  %v175 = vrot.slane %v139, 1
  %v176 = vsel %vm169, %v173, %v175
  %v177 = vrot.slane %v140, 1
  %v178 = vsel %vm169, %v175, %v177
  %v179 = vrot.slane %v141, 1
  %v180 = vsel %vm169, %v177, %v179
  %v181 = vrot.slane %v142, 1
  %v182 = vsel %vm169, %v179, %v181
  %v183 = vrot.slane %v143, 1
  %v184 = vsel %vm169, %v181, %v183
  %v185 = vrot.slane %v144, 1
  %v186 = vsel %vm169, %v183, %v185
  %v187 = vrot.slane %v145, 1
  %v188 = vsel %vm169, %v185, %v187
  %v189 = vrot.slane %v146, 1
  %v190 = vsel %vm169, %v187, %v189
  %v191 = vrot.slane %v147, 1
  %v192 = vsel %vm169, %v189, %v191
  %v193 = vrot.slane %v148, 1
  %v194 = vsel %vm169, %v191, %v193
  %v195 = vrot.slane %v149, 1
  %v196 = vsel %vm169, %v193, %v195
  %v197 = vrot.slane %v150, 1
  %v198 = vsel %vm169, %v195, %v197
  %v199 = vrot.slane %v151, 1
  %v200 = vsel %vm169, %v197, %v199
  %v201 = vrot.slane 0.0, 1
  %v202 = vsel %vm169, %v199, %v201
  %203 = vrot.lane.b32.xlu0 %v172, 4
  %v204 = vpop.permute.xlu0 %203
  %205 = vrot.lane.b32.xlu0 %v174, 4
  %v206 = vpop.permute.xlu0 %205
  %207 = vrot.lane.b32.xlu0 %v176, 4
  %v208 = vpop.permute.xlu0 %207
  %209 = vrot.lane.b32.xlu0 %v178, 4
  %v210 = vpop.permute.xlu0 %209
  %211 = vrot.lane.b32.xlu0 %v180, 4
  %v212 = vpop.permute.xlu0 %211
  %213 = vrot.lane.b32.xlu0 %v182, 4
  %v214 = vpop.permute.xlu0 %213
  %215 = vrot.lane.b32.xlu0 %v184, 4
  %v216 = vpop.permute.xlu0 %215
  %217 = vrot.lane.b32.xlu0 %v186, 4
  %v218 = vpop.permute.xlu0 %217
  %219 = vrot.lane.b32.xlu0 %v188, 4
  %v220 = vpop.permute.xlu0 %219
  %221 = vrot.lane.b32.xlu0 %v190, 4
  %v222 = vpop.permute.xlu0 %221
  %223 = vrot.lane.b32.xlu0 %v192, 4
  %v224 = vpop.permute.xlu0 %223
  %225 = vrot.lane.b32.xlu0 %v194, 4
  %v226 = vpop.permute.xlu0 %225
  %227 = vrot.lane.b32.xlu0 %v196, 4
  %v228 = vpop.permute.xlu0 %227
  %229 = vrot.lane.b32.xlu0 %v198, 4
  %v230 = vpop.permute.xlu0 %229
  %231 = vrot.lane.b32.xlu0 %v200, 4
  %v232 = vpop.permute.xlu0 %231
  %233 = vrot.lane.b32.xlu0 %v202, 4
  %v234 = vpop.permute.xlu0 %233
  %vm251 = vcmask 1045504
  %v252 = vrot.slane %v136, 2
  %v253 = vrot.slane %v137, 2
  %v254 = vsel %vm251, %v252, %v253
  %v255 = vrot.slane %v138, 2
  %v256 = vsel %vm251, %v253, %v255
  %v257 = vrot.slane %v139, 2
  %v258 = vsel %vm251, %v255, %v257
  %v259 = vrot.slane %v140, 2
  %v260 = vsel %vm251, %v257, %v259
  %v261 = vrot.slane %v141, 2
  %v262 = vsel %vm251, %v259, %v261
  %v263 = vrot.slane %v142, 2
  %v264 = vsel %vm251, %v261, %v263
  %v265 = vrot.slane %v143, 2
  %v266 = vsel %vm251, %v263, %v265
  %v267 = vrot.slane %v144, 2
  %v268 = vsel %vm251, %v265, %v267
  %v269 = vrot.slane %v145, 2
  %v270 = vsel %vm251, %v267, %v269
  %v271 = vrot.slane %v146, 2
  %v272 = vsel %vm251, %v269, %v271
  %v273 = vrot.slane %v147, 2
  %v274 = vsel %vm251, %v271, %v273
  %v275 = vrot.slane %v148, 2
  %v276 = vsel %vm251, %v273, %v275
  %v277 = vrot.slane %v149, 2
  %v278 = vsel %vm251, %v275, %v277
  %v279 = vrot.slane %v150, 2
  %v280 = vsel %vm251, %v277, %v279
  %v281 = vrot.slane %v151, 2
  %v282 = vsel %vm251, %v279, %v281
  %v283 = vrot.slane 0.0, 2
  %v284 = vsel %vm251, %v281, %v283
  %285 = vrot.lane.b32.xlu0 %v254, 8
  %v286 = vpop.permute.xlu0 %285
  %287 = vrot.lane.b32.xlu0 %v256, 8
  %v288 = vpop.permute.xlu0 %287
  %289 = vrot.lane.b32.xlu0 %v258, 8
  %v290 = vpop.permute.xlu0 %289
  %291 = vrot.lane.b32.xlu0 %v260, 8
  %v292 = vpop.permute.xlu0 %291
  %293 = vrot.lane.b32.xlu0 %v262, 8
  %v294 = vpop.permute.xlu0 %293
  %295 = vrot.lane.b32.xlu0 %v264, 8
  %v296 = vpop.permute.xlu0 %295
  %297 = vrot.lane.b32.xlu0 %v266, 8
  %v298 = vpop.permute.xlu0 %297
  %299 = vrot.lane.b32.xlu0 %v268, 8
  %v300 = vpop.permute.xlu0 %299
  %301 = vrot.lane.b32.xlu0 %v270, 8
  %v302 = vpop.permute.xlu0 %301
  %303 = vrot.lane.b32.xlu0 %v272, 8
  %v304 = vpop.permute.xlu0 %303
  %305 = vrot.lane.b32.xlu0 %v274, 8
  %v306 = vpop.permute.xlu0 %305
  %307 = vrot.lane.b32.xlu0 %v276, 8
  %v308 = vpop.permute.xlu0 %307
  %309 = vrot.lane.b32.xlu0 %v278, 8
  %v310 = vpop.permute.xlu0 %309
  %311 = vrot.lane.b32.xlu0 %v280, 8
  %v312 = vpop.permute.xlu0 %311
  %313 = vrot.lane.b32.xlu0 %v282, 8
  %v314 = vpop.permute.xlu0 %313
  %315 = vrot.lane.b32.xlu0 %v284, 8
  %v316 = vpop.permute.xlu0 %315
  %vm333 = vcmask 31744
  %v334 = vsel %vm333, %v136, %v204
  %v335 = vsel %vm333, %v137, %v206
  %v336 = vsel %vm333, %v138, %v208
  %v337 = vsel %vm333, %v139, %v210
  %v338 = vsel %vm333, %v140, %v212
  %v339 = vsel %vm333, %v141, %v214
  %v340 = vsel %vm333, %v142, %v216
  %v341 = vsel %vm333, %v143, %v218
  %v342 = vsel %vm333, %v144, %v220
  %v343 = vsel %vm333, %v145, %v222
  %v344 = vsel %vm333, %v146, %v224
  %v345 = vsel %vm333, %v147, %v226
  %v346 = vsel %vm333, %v148, %v228
  %v347 = vsel %vm333, %v149, %v230
  %v348 = vsel %vm333, %v150, %v232
  %v349 = vsel %vm333, %v151, %v234
  %vm350 = vcmask 64512
  %v351 = vsel %vm350, %v334, %v286
  %v352 = vsel %vm350, %v335, %v288
  %v353 = vsel %vm350, %v336, %v290
  %v354 = vsel %vm350, %v337, %v292
  %v355 = vsel %vm350, %v338, %v294
  %v356 = vsel %vm350, %v339, %v296
  %v357 = vsel %vm350, %v340, %v298
  %v358 = vsel %vm350, %v341, %v300
  %v359 = vsel %vm350, %v342, %v302
  %v360 = vsel %vm350, %v343, %v304
  %v361 = vsel %vm350, %v344, %v306
  %v362 = vsel %vm350, %v345, %v308
  %v363 = vsel %vm350, %v346, %v310
  %v364 = vsel %vm350, %v347, %v312
  %v365 = vsel %vm350, %v348, %v314
  %v366 = vsel %vm350, %v349, %v316
  %v367 = vld [vmem:[%s1] sm:$0xff]
  %v368 = vld [vmem:[%s1 + $0x8] sm:$0xf]
  %v369 = vld [vmem:[%s2] sm:$0x1]
  %v371 = vlaneseq
  %v372 = vshrl.u32 %v371, 7
  %v373 = vsub.s32 0, %v372
  %v374 = vrot.slane %v369, %v373
  %vm376 = vcmask 97280
  %v378 = vsel %vm376, %v351, 0
  %v381 = vsel %vm376, %v352, 0
  %v384 = vsel %vm376, %v353, 0
  %v387 = vsel %vm376, %v354, 0
  %v390 = vsel %vm376, %v355, 0
  %v393 = vsel %vm376, %v356, 0
  %v396 = vsel %vm376, %v357, 0
  %v399 = vsel %vm376, %v358, 0
  %v402 = vsel %vm376, %v359, 0
  %v405 = vsel %vm376, %v360, 0
  %v408 = vsel %vm376, %v361, 0
  %v411 = vsel %vm376, %v362, 0
  %v414 = vsel %vm376, %v363, 0
  %v417 = vsel %vm376, %v364, 0
  %v420 = vsel %vm376, %v365, 0
  %v423 = vsel %vm376, %v366, 0
  %vm425 = vcmask 1043456
  %v427 = vsel %vm425, %v368, 0
  %429 = vmatprep.subr.mxu0 0.0
  %430 = vmatpush1.msra.mxu0 0.0
  %431 = vmatprep.subr.mxu0 0.0
  %432 = vmatpush1.msra.mxu0 0.0
  %433 = vmatprep.subr.mxu0 0.0
  %434 = vmatpush1.msra.mxu0 0.0
  %435 = vmatprep.subr.mxu0 0.0
  %436 = vmatpush1.msra.mxu0 0.0
  %437 = vmatprep.subr.mxu0 0.0
  %438 = vmatpush1.msra.mxu0 0.0
  %439 = vmatprep.subr.mxu0 0.0
  %440 = vmatpush1.msra.mxu0 0.0
  %441 = vmatprep.subr.mxu0 0.0
  %442 = vmatpush1.msra.mxu0 0.0
  %443 = vmatprep.subr.mxu0 0.0
  %444 = vmatpush1.msra.mxu0 0.0
  %445 = vmatprep.subr.mxu0 0.0
  %446 = vmatpush1.msra.mxu0 0.0
  %447 = vmatprep.subr.mxu0 0.0
  %448 = vmatpush1.msra.mxu0 0.0
  %449 = vmatprep.subr.mxu0 0.0
  %450 = vmatpush1.msra.mxu0 0.0
  %451 = vmatprep.subr.mxu0 0.0
  %452 = vmatpush1.msra.mxu0 0.0
  %453 = vmatprep.subr.mxu0 0.0
  %454 = vmatpush1.msra.mxu0 0.0
  %455 = vmatprep.subr.mxu0 0.0
  %456 = vmatpush1.msra.mxu0 0.0
  %457 = vmatprep.subr.mxu0 0.0
  %458 = vmatpush1.msra.mxu0 %v427
  %459 = vmatprep.subr.mxu0 0.0
  %460 = vmatpush1.msra.mxu0 %v367
  %461 = vmatprep.subr.mxu0 0.0
  %462 = vmatpush2.msra.mxu0 0.0
  %463 = vmatprep.subr.mxu0 0.0
  %464 = vmatpush2.msra.mxu0 0.0
  %465 = vmatprep.subr.mxu0 0.0
  %466 = vmatpush2.msra.mxu0 0.0
  %467 = vmatprep.subr.mxu0 0.0
  %468 = vmatpush2.msra.mxu0 0.0
  %469 = vmatprep.subr.mxu0 0.0
  %470 = vmatpush2.msra.mxu0 0.0
  %471 = vmatprep.subr.mxu0 0.0
  %472 = vmatpush2.msra.mxu0 0.0
  %473 = vmatprep.subr.mxu0 0.0
  %474 = vmatpush2.msra.mxu0 0.0
  %475 = vmatprep.subr.mxu0 0.0
  %476 = vmatpush2.msra.mxu0 0.0
  %477 = vmatprep.subr.mxu0 0.0
  %478 = vmatpush2.msra.mxu0 0.0
  %479 = vmatprep.subr.mxu0 0.0
  %480 = vmatpush2.msra.mxu0 0.0
  %481 = vmatprep.subr.mxu0 0.0
  %482 = vmatpush2.msra.mxu0 0.0
  %483 = vmatprep.subr.mxu0 0.0
  %484 = vmatpush2.msra.mxu0 0.0
  %485 = vmatprep.subr.mxu0 0.0
  %486 = vmatpush2.msra.mxu0 0.0
  %487 = vmatprep.subr.mxu0 0.0
  %488 = vmatpush2.msra.mxu0 0.0
  %489 = vmatprep.subr.mxu0 0.0
  %490 = vmatpush2.msra.mxu0 0.0
  %491 = vmatprep.subr.mxu0 0.0
  %492 = vmatpush2.msra.mxu0 0.0
  %493 = vmatprep.mubr.f32.mxu0 0.0
  %494 = vmatmul.mubr.f32.gmra.mxu0 %v378
  %v495 = vpop.f32.mrf.mxu0
  %v496 = vadd.f32 %v374, %v495
  %v497 = vpop.f32.mrf.mxu0
  %498 = vmatprep.mubr.f32.mxu0 0.0
  %499 = vmatmul.mubr.f32.gmra.mxu0 %v381
  %v500 = vpop.f32.mrf.mxu0
  %v501 = vadd.f32 %v374, %v500
  %v502 = vpop.f32.mrf.mxu0
  %503 = vmatprep.mubr.f32.mxu0 0.0
  %504 = vmatmul.mubr.f32.gmra.mxu0 %v384
  %v505 = vpop.f32.mrf.mxu0
  %v506 = vadd.f32 %v374, %v505
  %v507 = vpop.f32.mrf.mxu0
  %508 = vmatprep.mubr.f32.mxu0 0.0
  %509 = vmatmul.mubr.f32.gmra.mxu0 %v387
  %v510 = vpop.f32.mrf.mxu0
  %v511 = vadd.f32 %v374, %v510
  %v512 = vpop.f32.mrf.mxu0
  %513 = vmatprep.mubr.f32.mxu0 0.0
  %514 = vmatmul.mubr.f32.gmra.mxu0 %v390
  %v515 = vpop.f32.mrf.mxu0
  %v516 = vadd.f32 %v374, %v515
  %v517 = vpop.f32.mrf.mxu0
  %518 = vmatprep.mubr.f32.mxu0 0.0
  %519 = vmatmul.mubr.f32.gmra.mxu0 %v393
  %v520 = vpop.f32.mrf.mxu0
  %v521 = vadd.f32 %v374, %v520
  %v522 = vpop.f32.mrf.mxu0
  %523 = vmatprep.mubr.f32.mxu0 0.0
  %524 = vmatmul.mubr.f32.gmra.mxu0 %v396
  %v525 = vpop.f32.mrf.mxu0
  %v526 = vadd.f32 %v374, %v525
  %v527 = vpop.f32.mrf.mxu0
  %528 = vmatprep.mubr.f32.mxu0 0.0
  %529 = vmatmul.mubr.f32.gmra.mxu0 %v399
  %v530 = vpop.f32.mrf.mxu0
  %v531 = vadd.f32 %v374, %v530
  %v532 = vpop.f32.mrf.mxu0
  %533 = vmatprep.mubr.f32.mxu0 0.0
  %534 = vmatmul.mubr.f32.gmra.mxu0 %v402
  %v535 = vpop.f32.mrf.mxu0
  %v536 = vadd.f32 %v374, %v535
  %v537 = vpop.f32.mrf.mxu0
  %538 = vmatprep.mubr.f32.mxu0 0.0
  %539 = vmatmul.mubr.f32.gmra.mxu0 %v405
  %v540 = vpop.f32.mrf.mxu0
  %v541 = vadd.f32 %v374, %v540
  %v542 = vpop.f32.mrf.mxu0
  %543 = vmatprep.mubr.f32.mxu0 0.0
  %544 = vmatmul.mubr.f32.gmra.mxu0 %v408
  %v545 = vpop.f32.mrf.mxu0
  %v546 = vadd.f32 %v374, %v545
  %v547 = vpop.f32.mrf.mxu0
  %548 = vmatprep.mubr.f32.mxu0 0.0
  %549 = vmatmul.mubr.f32.gmra.mxu0 %v411
  %v550 = vpop.f32.mrf.mxu0
  %v551 = vadd.f32 %v374, %v550
  %v552 = vpop.f32.mrf.mxu0
  %553 = vmatprep.mubr.f32.mxu0 0.0
  %554 = vmatmul.mubr.f32.gmra.mxu0 %v414
  %v555 = vpop.f32.mrf.mxu0
  %v556 = vadd.f32 %v374, %v555
  %v557 = vpop.f32.mrf.mxu0
  %558 = vmatprep.mubr.f32.mxu0 0.0
  %559 = vmatmul.mubr.f32.gmra.mxu0 %v417
  %v560 = vpop.f32.mrf.mxu0
  %v561 = vadd.f32 %v374, %v560
  %v562 = vpop.f32.mrf.mxu0
  %563 = vmatprep.mubr.f32.mxu0 0.0
  %564 = vmatmul.mubr.f32.gmra.mxu0 %v420
  %v565 = vpop.f32.mrf.mxu0
  %v566 = vadd.f32 %v374, %v565
  %v567 = vpop.f32.mrf.mxu0
  %568 = vmatprep.mubr.f32.mxu0 0.0
  %569 = vmatmul.mubr.f32.gmra.mxu0 %v423
  %v570 = vpop.f32.mrf.mxu0
  %v571 = vadd.f32 %v374, %v570
  %v572 = vpop.f32.mrf.mxu0
  %573 = vdwg.mxu0
  %v574 = vmax.f32 %v496, 0.0
  %v575 = vmax.f32 %v501, 0.0
  %v576 = vmax.f32 %v506, 0.0
  %v577 = vmax.f32 %v511, 0.0
  %v578 = vmax.f32 %v516, 0.0
  %v579 = vmax.f32 %v521, 0.0
  %v580 = vmax.f32 %v526, 0.0
  %v581 = vmax.f32 %v531, 0.0
  %v582 = vmax.f32 %v536, 0.0
  %v583 = vmax.f32 %v541, 0.0
  %v584 = vmax.f32 %v546, 0.0
  %v585 = vmax.f32 %v551, 0.0
  %v586 = vmax.f32 %v556, 0.0
  %v587 = vmax.f32 %v561, 0.0
  %v588 = vmax.f32 %v566, 0.0
  %v589 = vmax.f32 %v571, 0.0
  %v606 = vrot.slane %v574, 1
  %v607 = vrot.slane %v575, 1
  %v608 = vsel %vm169, %v606, %v607
  %v609 = vrot.slane %v576, 1
  %v610 = vsel %vm169, %v607, %v609
  %v611 = vrot.slane %v577, 1
  %v612 = vsel %vm169, %v609, %v611
  %v613 = vrot.slane %v578, 1
  %v614 = vsel %vm169, %v611, %v613
  %v615 = vrot.slane %v579, 1
  %v616 = vsel %vm169, %v613, %v615
  %v617 = vrot.slane %v580, 1
  %v618 = vsel %vm169, %v615, %v617
  %v619 = vrot.slane %v581, 1
  %v620 = vsel %vm169, %v617, %v619
  %v621 = vrot.slane %v582, 1
  %v622 = vsel %vm169, %v619, %v621
  %v623 = vrot.slane %v583, 1
  %v624 = vsel %vm169, %v621, %v623
  %v625 = vrot.slane %v584, 1
  %v626 = vsel %vm169, %v623, %v625
  %v627 = vrot.slane %v585, 1
  %v628 = vsel %vm169, %v625, %v627
  %v629 = vrot.slane %v586, 1
  %v630 = vsel %vm169, %v627, %v629
  %v631 = vrot.slane %v587, 1
  %v632 = vsel %vm169, %v629, %v631
  %v633 = vrot.slane %v588, 1
  %v634 = vsel %vm169, %v631, %v633
  %v635 = vrot.slane %v589, 1
  %v636 = vsel %vm169, %v633, %v635
  %v637 = vsel %vm169, %v635, %v201
  %638 = vrot.lane.b32.xlu0 %v608, 8
  %v639 = vpop.permute.xlu0 %638
  %640 = vrot.lane.b32.xlu0 %v610, 8
  %v641 = vpop.permute.xlu0 %640
  %642 = vrot.lane.b32.xlu0 %v612, 8
  %v643 = vpop.permute.xlu0 %642
  %644 = vrot.lane.b32.xlu0 %v614, 8
  %v645 = vpop.permute.xlu0 %644
  %646 = vrot.lane.b32.xlu0 %v616, 8
  %v647 = vpop.permute.xlu0 %646
  %648 = vrot.lane.b32.xlu0 %v618, 8
  %v649 = vpop.permute.xlu0 %648
  %650 = vrot.lane.b32.xlu0 %v620, 8
  %v651 = vpop.permute.xlu0 %650
  %652 = vrot.lane.b32.xlu0 %v622, 8
  %v653 = vpop.permute.xlu0 %652
  %654 = vrot.lane.b32.xlu0 %v624, 8
  %v655 = vpop.permute.xlu0 %654
  %656 = vrot.lane.b32.xlu0 %v626, 8
  %v657 = vpop.permute.xlu0 %656
  %658 = vrot.lane.b32.xlu0 %v628, 8
  %v659 = vpop.permute.xlu0 %658
  %660 = vrot.lane.b32.xlu0 %v630, 8
  %v661 = vpop.permute.xlu0 %660
  %662 = vrot.lane.b32.xlu0 %v632, 8
  %v663 = vpop.permute.xlu0 %662
  %664 = vrot.lane.b32.xlu0 %v634, 8
  %v665 = vpop.permute.xlu0 %664
  %666 = vrot.lane.b32.xlu0 %v636, 8
  %v667 = vpop.permute.xlu0 %666
  %668 = vrot.lane.b32.xlu0 %v637, 8
  %v669 = vpop.permute.xlu0 %668
  %v686 = vrot.slane %v574, 2
  %v687 = vrot.slane %v575, 2
  %v688 = vsel %vm251, %v686, %v687
  %v689 = vrot.slane %v576, 2
  %v690 = vsel %vm251, %v687, %v689
  %v691 = vrot.slane %v577, 2
  %v692 = vsel %vm251, %v689, %v691
  %v693 = vrot.slane %v578, 2
  %v694 = vsel %vm251, %v691, %v693
  %v695 = vrot.slane %v579, 2
  %v696 = vsel %vm251, %v693, %v695
  %v697 = vrot.slane %v580, 2
  %v698 = vsel %vm251, %v695, %v697
  %v699 = vrot.slane %v581, 2
  %v700 = vsel %vm251, %v697, %v699
  %v701 = vrot.slane %v582, 2
  %v702 = vsel %vm251, %v699, %v701
  %v703 = vrot.slane %v583, 2
  %v704 = vsel %vm251, %v701, %v703
  %v705 = vrot.slane %v584, 2
  %v706 = vsel %vm251, %v703, %v705
  %v707 = vrot.slane %v585, 2
  %v708 = vsel %vm251, %v705, %v707
  %v709 = vrot.slane %v586, 2
  %v710 = vsel %vm251, %v707, %v709
  %v711 = vrot.slane %v587, 2
  %v712 = vsel %vm251, %v709, %v711
  %v713 = vrot.slane %v588, 2
  %v714 = vsel %vm251, %v711, %v713
  %v715 = vrot.slane %v589, 2
  %v716 = vsel %vm251, %v713, %v715
  %v717 = vsel %vm251, %v715, %v283
  %718 = vrot.lane.b32.xlu0 %v688, 16
  %v719 = vpop.permute.xlu0 %718
  %720 = vrot.lane.b32.xlu0 %v690, 16
  %v721 = vpop.permute.xlu0 %720
  %722 = vrot.lane.b32.xlu0 %v692, 16
  %v723 = vpop.permute.xlu0 %722
  %724 = vrot.lane.b32.xlu0 %v694, 16
  %v725 = vpop.permute.xlu0 %724
  %726 = vrot.lane.b32.xlu0 %v696, 16
  %v727 = vpop.permute.xlu0 %726
  %728 = vrot.lane.b32.xlu0 %v698, 16
  %v729 = vpop.permute.xlu0 %728
  %730 = vrot.lane.b32.xlu0 %v700, 16
  %v731 = vpop.permute.xlu0 %730
  %732 = vrot.lane.b32.xlu0 %v702, 16
  %v733 = vpop.permute.xlu0 %732
  %734 = vrot.lane.b32.xlu0 %v704, 16
  %v735 = vpop.permute.xlu0 %734
  %736 = vrot.lane.b32.xlu0 %v706, 16
  %v737 = vpop.permute.xlu0 %736
  %738 = vrot.lane.b32.xlu0 %v708, 16
  %v739 = vpop.permute.xlu0 %738
  %740 = vrot.lane.b32.xlu0 %v710, 16
  %v741 = vpop.permute.xlu0 %740
  %742 = vrot.lane.b32.xlu0 %v712, 16
  %v743 = vpop.permute.xlu0 %742
  %744 = vrot.lane.b32.xlu0 %v714, 16
  %v745 = vpop.permute.xlu0 %744
  %746 = vrot.lane.b32.xlu0 %v716, 16
  %v747 = vpop.permute.xlu0 %746
  %748 = vrot.lane.b32.xlu0 %v717, 16
  %v749 = vpop.permute.xlu0 %748
  %v766 = vsel %vm350, %v574, %v639
  %v767 = vsel %vm350, %v575, %v641
  %v768 = vsel %vm350, %v576, %v643
  %v769 = vsel %vm350, %v577, %v645
  %v770 = vsel %vm350, %v578, %v647
  %v771 = vsel %vm350, %v579, %v649
  %v772 = vsel %vm350, %v580, %v651
  %v773 = vsel %vm350, %v581, %v653
  %v774 = vsel %vm350, %v582, %v655
  %v775 = vsel %vm350, %v583, %v657
  %v776 = vsel %vm350, %v584, %v659
  %v777 = vsel %vm350, %v585, %v661
  %v778 = vsel %vm350, %v586, %v663
  %v779 = vsel %vm350, %v587, %v665
  %v780 = vsel %vm350, %v588, %v667
  %v781 = vsel %vm350, %v589, %v669
  %vm782 = vcmask 130048
  %v783 = vsel %vm782, %v766, %v719
  %v784 = vsel %vm782, %v767, %v721
  %v785 = vsel %vm782, %v768, %v723
  %v786 = vsel %vm782, %v769, %v725
  %v787 = vsel %vm782, %v770, %v727
  %v788 = vsel %vm782, %v771, %v729
  %v789 = vsel %vm782, %v772, %v731
  %v790 = vsel %vm782, %v773, %v733
  %v791 = vsel %vm782, %v774, %v735
  %v792 = vsel %vm782, %v775, %v737
  %v793 = vsel %vm782, %v776, %v739
  %v794 = vsel %vm782, %v777, %v741
  %v795 = vsel %vm782, %v778, %v743
  %v796 = vsel %vm782, %v779, %v745
  %v797 = vsel %vm782, %v780, %v747
  %v798 = vsel %vm782, %v781, %v749
  %v799 = vld [vmem:[%s3] sm:$0xff]
  %v800 = vld [vmem:[%s3 + $0x8] sm:$0xff]
  %v801 = vld [vmem:[%s3 + $0x10] sm:$0xff]
  %v802 = vld [vmem:[%s4] sm:$0x1]
  %v804 = vlaneseq
  %v805 = vshrl.u32 %v804, 7
  %v806 = vsub.s32 0, %v805
  %v807 = vrot.slane %v802, %v806
  %vm809 = vcmask 195584
  %v811 = vsel %vm809, %v783, 0
  %v814 = vsel %vm809, %v784, 0
  %v817 = vsel %vm809, %v785, 0
  %v820 = vsel %vm809, %v786, 0
  %v823 = vsel %vm809, %v787, 0
  %v826 = vsel %vm809, %v788, 0
  %v829 = vsel %vm809, %v789, 0
  %v832 = vsel %vm809, %v790, 0
  %v835 = vsel %vm809, %v791, 0
  %v838 = vsel %vm809, %v792, 0
  %v841 = vsel %vm809, %v793, 0
  %v844 = vsel %vm809, %v794, 0
  %v847 = vsel %vm809, %v795, 0
  %v850 = vsel %vm809, %v796, 0
  %v853 = vsel %vm809, %v797, 0
  %v856 = vsel %vm809, %v798, 0
  %858 = vmatprep.subr.mxu0 0.0
  %859 = vmatpush1.msra.mxu0 0.0
  %860 = vmatprep.subr.mxu0 0.0
  %861 = vmatpush1.msra.mxu0 0.0
  %862 = vmatprep.subr.mxu0 0.0
  %863 = vmatpush1.msra.mxu0 0.0
  %864 = vmatprep.subr.mxu0 0.0
  %865 = vmatpush1.msra.mxu0 0.0
  %866 = vmatprep.subr.mxu0 0.0
  %867 = vmatpush1.msra.mxu0 0.0
  %868 = vmatprep.subr.mxu0 0.0
  %869 = vmatpush1.msra.mxu0 0.0
  %870 = vmatprep.subr.mxu0 0.0
  %871 = vmatpush1.msra.mxu0 0.0
  %872 = vmatprep.subr.mxu0 0.0
  %873 = vmatpush1.msra.mxu0 0.0
  %874 = vmatprep.subr.mxu0 0.0
  %875 = vmatpush1.msra.mxu0 0.0
  %876 = vmatprep.subr.mxu0 0.0
  %877 = vmatpush1.msra.mxu0 0.0
  %878 = vmatprep.subr.mxu0 0.0
  %879 = vmatpush1.msra.mxu0 0.0
  %880 = vmatprep.subr.mxu0 0.0
  %881 = vmatpush1.msra.mxu0 0.0
  %882 = vmatprep.subr.mxu0 0.0
  %883 = vmatpush1.msra.mxu0 0.0
  %884 = vmatprep.subr.mxu0 0.0
  %885 = vmatpush1.msra.mxu0 %v801
  %886 = vmatprep.subr.mxu0 0.0
  %887 = vmatpush1.msra.mxu0 %v800
  %888 = vmatprep.subr.mxu0 0.0
  %889 = vmatpush1.msra.mxu0 %v799
  %890 = vmatprep.subr.mxu0 0.0
  %891 = vmatpush2.msra.mxu0 0.0
  %892 = vmatprep.subr.mxu0 0.0
  %893 = vmatpush2.msra.mxu0 0.0
  %894 = vmatprep.subr.mxu0 0.0
  %895 = vmatpush2.msra.mxu0 0.0
  %896 = vmatprep.subr.mxu0 0.0
  %897 = vmatpush2.msra.mxu0 0.0
  %898 = vmatprep.subr.mxu0 0.0
  %899 = vmatpush2.msra.mxu0 0.0
  %900 = vmatprep.subr.mxu0 0.0
  %901 = vmatpush2.msra.mxu0 0.0
  %902 = vmatprep.subr.mxu0 0.0
  %903 = vmatpush2.msra.mxu0 0.0
  %904 = vmatprep.subr.mxu0 0.0
  %905 = vmatpush2.msra.mxu0 0.0
  %906 = vmatprep.subr.mxu0 0.0
  %907 = vmatpush2.msra.mxu0 0.0
  %908 = vmatprep.subr.mxu0 0.0
  %909 = vmatpush2.msra.mxu0 0.0
  %910 = vmatprep.subr.mxu0 0.0
  %911 = vmatpush2.msra.mxu0 0.0
  %912 = vmatprep.subr.mxu0 0.0
  %913 = vmatpush2.msra.mxu0 0.0
  %914 = vmatprep.subr.mxu0 0.0
  %915 = vmatpush2.msra.mxu0 0.0
  %916 = vmatprep.subr.mxu0 0.0
  %917 = vmatpush2.msra.mxu0 0.0
  %918 = vmatprep.subr.mxu0 0.0
  %919 = vmatpush2.msra.mxu0 0.0
  %920 = vmatprep.subr.mxu0 0.0
  %921 = vmatpush2.msra.mxu0 0.0
  %922 = vmatprep.mubr.f32.mxu0 0.0
  %923 = vmatmul.mubr.f32.gmra.mxu0 %v811
  %v924 = vpop.f32.mrf.mxu0
  %v925 = vadd.f32 %v807, %v924
  %v926 = vpop.f32.mrf.mxu0
  %927 = vmatprep.mubr.f32.mxu0 0.0
  %928 = vmatmul.mubr.f32.gmra.mxu0 %v814
  %v929 = vpop.f32.mrf.mxu0
  %v930 = vadd.f32 %v807, %v929
  %v931 = vpop.f32.mrf.mxu0
  %932 = vmatprep.mubr.f32.mxu0 0.0
  %933 = vmatmul.mubr.f32.gmra.mxu0 %v817
  %v934 = vpop.f32.mrf.mxu0
  %v935 = vadd.f32 %v807, %v934
  %v936 = vpop.f32.mrf.mxu0
  %937 = vmatprep.mubr.f32.mxu0 0.0
  %938 = vmatmul.mubr.f32.gmra.mxu0 %v820
  %v939 = vpop.f32.mrf.mxu0
  %v940 = vadd.f32 %v807, %v939
  %v941 = vpop.f32.mrf.mxu0
  %942 = vmatprep.mubr.f32.mxu0 0.0
  %943 = vmatmul.mubr.f32.gmra.mxu0 %v823
  %v944 = vpop.f32.mrf.mxu0
  %v945 = vadd.f32 %v807, %v944
  %v946 = vpop.f32.mrf.mxu0
  %947 = vmatprep.mubr.f32.mxu0 0.0
  %948 = vmatmul.mubr.f32.gmra.mxu0 %v826
  %v949 = vpop.f32.mrf.mxu0
  %v950 = vadd.f32 %v807, %v949
  %v951 = vpop.f32.mrf.mxu0
  %952 = vmatprep.mubr.f32.mxu0 0.0
  %953 = vmatmul.mubr.f32.gmra.mxu0 %v829
  %v954 = vpop.f32.mrf.mxu0
  %v955 = vadd.f32 %v807, %v954
  %v956 = vpop.f32.mrf.mxu0
  %957 = vmatprep.mubr.f32.mxu0 0.0
  %958 = vmatmul.mubr.f32.gmra.mxu0 %v832
  %v959 = vpop.f32.mrf.mxu0
  %v960 = vadd.f32 %v807, %v959
  %v961 = vpop.f32.mrf.mxu0
  %962 = vmatprep.mubr.f32.mxu0 0.0
  %963 = vmatmul.mubr.f32.gmra.mxu0 %v835
  %v964 = vpop.f32.mrf.mxu0
  %v965 = vadd.f32 %v807, %v964
  %v966 = vpop.f32.mrf.mxu0
  %967 = vmatprep.mubr.f32.mxu0 0.0
  %968 = vmatmul.mubr.f32.gmra.mxu0 %v838
  %v969 = vpop.f32.mrf.mxu0
  %v970 = vadd.f32 %v807, %v969
  %v971 = vpop.f32.mrf.mxu0
  %972 = vmatprep.mubr.f32.mxu0 0.0
  %973 = vmatmul.mubr.f32.gmra.mxu0 %v841
  %v974 = vpop.f32.mrf.mxu0
  %v975 = vadd.f32 %v807, %v974
  %v976 = vpop.f32.mrf.mxu0
  %977 = vmatprep.mubr.f32.mxu0 0.0
  %978 = vmatmul.mubr.f32.gmra.mxu0 %v844
  %v979 = vpop.f32.mrf.mxu0
  %v980 = vadd.f32 %v807, %v979
  %v981 = vpop.f32.mrf.mxu0
  %982 = vmatprep.mubr.f32.mxu0 0.0
  %983 = vmatmul.mubr.f32.gmra.mxu0 %v847
  %v984 = vpop.f32.mrf.mxu0
  %v985 = vadd.f32 %v807, %v984
  %v986 = vpop.f32.mrf.mxu0
  %987 = vmatprep.mubr.f32.mxu0 0.0
  %988 = vmatmul.mubr.f32.gmra.mxu0 %v850
  %v989 = vpop.f32.mrf.mxu0
  %v990 = vadd.f32 %v807, %v989
  %v991 = vpop.f32.mrf.mxu0
  %992 = vmatprep.mubr.f32.mxu0 0.0
  %993 = vmatmul.mubr.f32.gmra.mxu0 %v853
  %v994 = vpop.f32.mrf.mxu0
  %v995 = vadd.f32 %v807, %v994
  %v996 = vpop.f32.mrf.mxu0
  %997 = vmatprep.mubr.f32.mxu0 0.0
  %998 = vmatmul.mubr.f32.gmra.mxu0 %v856
  %v999 = vpop.f32.mrf.mxu0
  %v1000 = vadd.f32 %v807, %v999
  %v1001 = vpop.f32.mrf.mxu0
  %1002 = vdwg.mxu0
  %v1003 = vmax.f32 %v925, 0.0
  %v1004 = vmax.f32 %v930, 0.0
  %v1005 = vmax.f32 %v935, 0.0
  %v1006 = vmax.f32 %v940, 0.0
  %v1007 = vmax.f32 %v945, 0.0
  %v1008 = vmax.f32 %v950, 0.0
  %v1009 = vmax.f32 %v955, 0.0
  %v1010 = vmax.f32 %v960, 0.0
  %v1011 = vmax.f32 %v965, 0.0
  %v1012 = vmax.f32 %v970, 0.0
  %v1013 = vmax.f32 %v975, 0.0
  %v1014 = vmax.f32 %v980, 0.0
  %v1015 = vmax.f32 %v985, 0.0
  %v1016 = vmax.f32 %v990, 0.0
  %v1017 = vmax.f32 %v995, 0.0
  %v1018 = vmax.f32 %v1000, 0.0
  %v1035 = vrot.slane %v1003, 1
  %v1036 = vrot.slane %v1004, 1
  %v1037 = vsel %vm169, %v1035, %v1036
  %v1038 = vrot.slane %v1005, 1
  %v1039 = vsel %vm169, %v1036, %v1038
  %v1040 = vrot.slane %v1006, 1
  %v1041 = vsel %vm169, %v1038, %v1040
  %v1042 = vrot.slane %v1007, 1
  %v1043 = vsel %vm169, %v1040, %v1042
  %v1044 = vrot.slane %v1008, 1
  %v1045 = vsel %vm169, %v1042, %v1044
  %v1046 = vrot.slane %v1009, 1
  %v1047 = vsel %vm169, %v1044, %v1046
  %v1048 = vrot.slane %v1010, 1
  %v1049 = vsel %vm169, %v1046, %v1048
  %v1050 = vrot.slane %v1011, 1
  %v1051 = vsel %vm169, %v1048, %v1050
  %v1052 = vrot.slane %v1012, 1
  %v1053 = vsel %vm169, %v1050, %v1052
  %v1054 = vrot.slane %v1013, 1
  %v1055 = vsel %vm169, %v1052, %v1054
  %v1056 = vrot.slane %v1014, 1
  %v1057 = vsel %vm169, %v1054, %v1056
  %v1058 = vrot.slane %v1015, 1
  %v1059 = vsel %vm169, %v1056, %v1058
  %v1060 = vrot.slane %v1016, 1
  %v1061 = vsel %vm169, %v1058, %v1060
  %v1062 = vrot.slane %v1017, 1
  %v1063 = vsel %vm169, %v1060, %v1062
  %v1064 = vrot.slane %v1018, 1
  %v1065 = vsel %vm169, %v1062, %v1064
  %v1066 = vsel %vm169, %v1064, %v201
  %1067 = vrot.lane.b32.xlu0 %v1037, 16
  %v1068 = vpop.permute.xlu0 %1067
  %1069 = vrot.lane.b32.xlu0 %v1039, 16
  %v1070 = vpop.permute.xlu0 %1069
  %1071 = vrot.lane.b32.xlu0 %v1041, 16
  %v1072 = vpop.permute.xlu0 %1071
  %1073 = vrot.lane.b32.xlu0 %v1043, 16
  %v1074 = vpop.permute.xlu0 %1073
  %1075 = vrot.lane.b32.xlu0 %v1045, 16
  %v1076 = vpop.permute.xlu0 %1075
  %1077 = vrot.lane.b32.xlu0 %v1047, 16
  %v1078 = vpop.permute.xlu0 %1077
  %1079 = vrot.lane.b32.xlu0 %v1049, 16
  %v1080 = vpop.permute.xlu0 %1079
  %1081 = vrot.lane.b32.xlu0 %v1051, 16
  %v1082 = vpop.permute.xlu0 %1081
  %1083 = vrot.lane.b32.xlu0 %v1053, 16
  %v1084 = vpop.permute.xlu0 %1083
  %1085 = vrot.lane.b32.xlu0 %v1055, 16
  %v1086 = vpop.permute.xlu0 %1085
  %1087 = vrot.lane.b32.xlu0 %v1057, 16
  %v1088 = vpop.permute.xlu0 %1087
  %1089 = vrot.lane.b32.xlu0 %v1059, 16
  %v1090 = vpop.permute.xlu0 %1089
  %1091 = vrot.lane.b32.xlu0 %v1061, 16
  %v1092 = vpop.permute.xlu0 %1091
  %1093 = vrot.lane.b32.xlu0 %v1063, 16
  %v1094 = vpop.permute.xlu0 %1093
  %1095 = vrot.lane.b32.xlu0 %v1065, 16
  %v1096 = vpop.permute.xlu0 %1095
  %1097 = vrot.lane.b32.xlu0 %v1066, 16
  %v1098 = vpop.permute.xlu0 %1097
  %v1115 = vrot.slane %v1003, 2
  %v1116 = vrot.slane %v1004, 2
  %v1117 = vsel %vm251, %v1115, %v1116
  %v1118 = vrot.slane %v1005, 2
  %v1119 = vsel %vm251, %v1116, %v1118
  %v1120 = vrot.slane %v1006, 2
  %v1121 = vsel %vm251, %v1118, %v1120
  %v1122 = vrot.slane %v1007, 2
  %v1123 = vsel %vm251, %v1120, %v1122
  %v1124 = vrot.slane %v1008, 2
  %v1125 = vsel %vm251, %v1122, %v1124
  %v1126 = vrot.slane %v1009, 2
  %v1127 = vsel %vm251, %v1124, %v1126
  %v1128 = vrot.slane %v1010, 2
  %v1129 = vsel %vm251, %v1126, %v1128
  %v1130 = vrot.slane %v1011, 2
  %v1131 = vsel %vm251, %v1128, %v1130
  %v1132 = vrot.slane %v1012, 2
  %v1133 = vsel %vm251, %v1130, %v1132
  %v1134 = vrot.slane %v1013, 2
  %v1135 = vsel %vm251, %v1132, %v1134
  %v1136 = vrot.slane %v1014, 2
  %v1137 = vsel %vm251, %v1134, %v1136
  %v1138 = vrot.slane %v1015, 2
  %v1139 = vsel %vm251, %v1136, %v1138
  %v1140 = vrot.slane %v1016, 2
  %v1141 = vsel %vm251, %v1138, %v1140
  %v1142 = vrot.slane %v1017, 2
  %v1143 = vsel %vm251, %v1140, %v1142
  %v1144 = vrot.slane %v1018, 2
  %v1145 = vsel %vm251, %v1142, %v1144
  %v1146 = vsel %vm251, %v1144, %v283
  %1147 = vrot.lane.b32.xlu0 %v1117, 32
  %v1148 = vpop.permute.xlu0 %1147
  %1149 = vrot.lane.b32.xlu0 %v1119, 32
  %v1150 = vpop.permute.xlu0 %1149
  %1151 = vrot.lane.b32.xlu0 %v1121, 32
  %v1152 = vpop.permute.xlu0 %1151
  %1153 = vrot.lane.b32.xlu0 %v1123, 32
  %v1154 = vpop.permute.xlu0 %1153
  %1155 = vrot.lane.b32.xlu0 %v1125, 32
  %v1156 = vpop.permute.xlu0 %1155
  %1157 = vrot.lane.b32.xlu0 %v1127, 32
  %v1158 = vpop.permute.xlu0 %1157
  %1159 = vrot.lane.b32.xlu0 %v1129, 32
  %v1160 = vpop.permute.xlu0 %1159
  %1161 = vrot.lane.b32.xlu0 %v1131, 32
  %v1162 = vpop.permute.xlu0 %1161
  %1163 = vrot.lane.b32.xlu0 %v1133, 32
  %v1164 = vpop.permute.xlu0 %1163
  %1165 = vrot.lane.b32.xlu0 %v1135, 32
  %v1166 = vpop.permute.xlu0 %1165
  %1167 = vrot.lane.b32.xlu0 %v1137, 32
  %v1168 = vpop.permute.xlu0 %1167
  %1169 = vrot.lane.b32.xlu0 %v1139, 32
  %v1170 = vpop.permute.xlu0 %1169
  %1171 = vrot.lane.b32.xlu0 %v1141, 32
  %v1172 = vpop.permute.xlu0 %1171
  %1173 = vrot.lane.b32.xlu0 %v1143, 32
  %v1174 = vpop.permute.xlu0 %1173
  %1175 = vrot.lane.b32.xlu0 %v1145, 32
  %v1176 = vpop.permute.xlu0 %1175
  %1177 = vrot.lane.b32.xlu0 %v1146, 32
  %v1178 = vpop.permute.xlu0 %1177
  %v1195 = vsel %vm782, %v1003, %v1068
  %v1196 = vsel %vm782, %v1004, %v1070
  %v1197 = vsel %vm782, %v1005, %v1072
  %v1198 = vsel %vm782, %v1006, %v1074
  %v1199 = vsel %vm782, %v1007, %v1076
  %v1200 = vsel %vm782, %v1008, %v1078
  %v1201 = vsel %vm782, %v1009, %v1080
  %v1202 = vsel %vm782, %v1010, %v1082
  %v1203 = vsel %vm782, %v1011, %v1084
  %v1204 = vsel %vm782, %v1012, %v1086
  %v1205 = vsel %vm782, %v1013, %v1088
  %v1206 = vsel %vm782, %v1014, %v1090
  %v1207 = vsel %vm782, %v1015, %v1092
  %v1208 = vsel %vm782, %v1016, %v1094
  %v1209 = vsel %vm782, %v1017, %v1096
  %v1210 = vsel %vm782, %v1018, %v1098
  %vm1211 = vcmask 261120
  %v1212 = vsel %vm1211, %v1195, %v1148
  %v1213 = vsel %vm1211, %v1196, %v1150
  %v1214 = vsel %vm1211, %v1197, %v1152
  %v1215 = vsel %vm1211, %v1198, %v1154
  %v1216 = vsel %vm1211, %v1199, %v1156
  %v1217 = vsel %vm1211, %v1200, %v1158
  %v1218 = vsel %vm1211, %v1201, %v1160
  %v1219 = vsel %vm1211, %v1202, %v1162
  %v1220 = vsel %vm1211, %v1203, %v1164
  %v1221 = vsel %vm1211, %v1204, %v1166
  %v1222 = vsel %vm1211, %v1205, %v1168
  %v1223 = vsel %vm1211, %v1206, %v1170
  %v1224 = vsel %vm1211, %v1207, %v1172
  %v1225 = vsel %vm1211, %v1208, %v1174
  %v1226 = vsel %vm1211, %v1209, %v1176
  %v1227 = vsel %vm1211, %v1210, %v1178
  %v1228 = vld [vmem:[%s5] sm:$0xff]
  %v1229 = vld [vmem:[%s5 + $0x8] sm:$0xff]
  %v1230 = vld [vmem:[%s5 + $0x10] sm:$0xff]
  %v1231 = vld [vmem:[%s5 + $0x18] sm:$0xff]
  %v1232 = vld [vmem:[%s5 + $0x20] sm:$0xff]
  %v1233 = vld [vmem:[%s5 + $0x28] sm:$0xff]
  %v1234 = vld [vmem:[%s6] sm:$0x1]
  %v1236 = vlaneseq
  %v1237 = vshrl.u32 %v1236, 7
  %v1238 = vsub.s32 0, %v1237
  %v1239 = vrot.slane %v1234, %v1238
  %vm1241 = vcmask 392192
  %v1243 = vsel %vm1241, %v1212, 0
  %v1246 = vsel %vm1241, %v1213, 0
  %v1249 = vsel %vm1241, %v1214, 0
  %v1252 = vsel %vm1241, %v1215, 0
  %v1255 = vsel %vm1241, %v1216, 0
  %v1258 = vsel %vm1241, %v1217, 0
  %v1261 = vsel %vm1241, %v1218, 0
  %v1264 = vsel %vm1241, %v1219, 0
  %v1267 = vsel %vm1241, %v1220, 0
  %v1270 = vsel %vm1241, %v1221, 0
  %v1273 = vsel %vm1241, %v1222, 0
  %v1276 = vsel %vm1241, %v1223, 0
  %v1279 = vsel %vm1241, %v1224, 0
  %v1282 = vsel %vm1241, %v1225, 0
  %v1285 = vsel %vm1241, %v1226, 0
  %v1288 = vsel %vm1241, %v1227, 0
  %1290 = vmatprep.subr.mxu0 0.0
  %1291 = vmatpush1.msra.mxu0 0.0
  %1292 = vmatprep.subr.mxu0 0.0
  %1293 = vmatpush1.msra.mxu0 0.0
  %1294 = vmatprep.subr.mxu0 0.0
  %1295 = vmatpush1.msra.mxu0 0.0
  %1296 = vmatprep.subr.mxu0 0.0
  %1297 = vmatpush1.msra.mxu0 0.0
  %1298 = vmatprep.subr.mxu0 0.0
  %1299 = vmatpush1.msra.mxu0 0.0
  %1300 = vmatprep.subr.mxu0 0.0
  %1301 = vmatpush1.msra.mxu0 0.0
  %1302 = vmatprep.subr.mxu0 0.0
  %1303 = vmatpush1.msra.mxu0 0.0
  %1304 = vmatprep.subr.mxu0 0.0
  %1305 = vmatpush1.msra.mxu0 0.0
  %1306 = vmatprep.subr.mxu0 0.0
  %1307 = vmatpush1.msra.mxu0 0.0
  %1308 = vmatprep.subr.mxu0 0.0
  %1309 = vmatpush1.msra.mxu0 0.0
  %1310 = vmatprep.subr.mxu0 0.0
  %1311 = vmatpush1.msra.mxu0 %v1233
  %1312 = vmatprep.subr.mxu0 0.0
  %1313 = vmatpush1.msra.mxu0 %v1232
  %1314 = vmatprep.subr.mxu0 0.0
  %1315 = vmatpush1.msra.mxu0 %v1231
  %1316 = vmatprep.subr.mxu0 0.0
  %1317 = vmatpush1.msra.mxu0 %v1230
  %1318 = vmatprep.subr.mxu0 0.0
  %1319 = vmatpush1.msra.mxu0 %v1229
  %1320 = vmatprep.subr.mxu0 0.0
  %1321 = vmatpush1.msra.mxu0 %v1228
  %1322 = vmatprep.subr.mxu0 0.0
  %1323 = vmatpush2.msra.mxu0 0.0
  %1324 = vmatprep.subr.mxu0 0.0
  %1325 = vmatpush2.msra.mxu0 0.0
  %1326 = vmatprep.subr.mxu0 0.0
  %1327 = vmatpush2.msra.mxu0 0.0
  %1328 = vmatprep.subr.mxu0 0.0
  %1329 = vmatpush2.msra.mxu0 0.0
  %1330 = vmatprep.subr.mxu0 0.0
  %1331 = vmatpush2.msra.mxu0 0.0
  %1332 = vmatprep.subr.mxu0 0.0
  %1333 = vmatpush2.msra.mxu0 0.0
  %1334 = vmatprep.subr.mxu0 0.0
  %1335 = vmatpush2.msra.mxu0 0.0
  %1336 = vmatprep.subr.mxu0 0.0
  %1337 = vmatpush2.msra.mxu0 0.0
  %1338 = vmatprep.subr.mxu0 0.0
  %1339 = vmatpush2.msra.mxu0 0.0
  %1340 = vmatprep.subr.mxu0 0.0
  %1341 = vmatpush2.msra.mxu0 0.0
  %1342 = vmatprep.subr.mxu0 0.0
  %1343 = vmatpush2.msra.mxu0 0.0
  %1344 = vmatprep.subr.mxu0 0.0
  %1345 = vmatpush2.msra.mxu0 0.0
  %1346 = vmatprep.subr.mxu0 0.0
  %1347 = vmatpush2.msra.mxu0 0.0
  %1348 = vmatprep.subr.mxu0 0.0
  %1349 = vmatpush2.msra.mxu0 0.0
  %1350 = vmatprep.subr.mxu0 0.0
  %1351 = vmatpush2.msra.mxu0 0.0
  %1352 = vmatprep.subr.mxu0 0.0
  %1353 = vmatpush2.msra.mxu0 0.0
  %1354 = vmatprep.mubr.f32.mxu0 0.0
  %1355 = vmatmul.mubr.f32.gmra.mxu0 %v1243
  %v1356 = vpop.f32.mrf.mxu0
  %v1357 = vadd.f32 %v1239, %v1356
  %v1358 = vpop.f32.mrf.mxu0
  %1359 = vmatprep.mubr.f32.mxu0 0.0
  %1360 = vmatmul.mubr.f32.gmra.mxu0 %v1246
  %v1361 = vpop.f32.mrf.mxu0
  %v1362 = vadd.f32 %v1239, %v1361
  %v1363 = vpop.f32.mrf.mxu0
  %1364 = vmatprep.mubr.f32.mxu0 0.0
  %1365 = vmatmul.mubr.f32.gmra.mxu0 %v1249
  %v1366 = vpop.f32.mrf.mxu0
  %v1367 = vadd.f32 %v1239, %v1366
  %v1368 = vpop.f32.mrf.mxu0
  %1369 = vmatprep.mubr.f32.mxu0 0.0
  %1370 = vmatmul.mubr.f32.gmra.mxu0 %v1252
  %v1371 = vpop.f32.mrf.mxu0
  %v1372 = vadd.f32 %v1239, %v1371
  %v1373 = vpop.f32.mrf.mxu0
  %1374 = vmatprep.mubr.f32.mxu0 0.0
  %1375 = vmatmul.mubr.f32.gmra.mxu0 %v1255
  %v1376 = vpop.f32.mrf.mxu0
  %v1377 = vadd.f32 %v1239, %v1376
  %v1378 = vpop.f32.mrf.mxu0
  %1379 = vmatprep.mubr.f32.mxu0 0.0
  %1380 = vmatmul.mubr.f32.gmra.mxu0 %v1258
  %v1381 = vpop.f32.mrf.mxu0
  %v1382 = vadd.f32 %v1239, %v1381
  %v1383 = vpop.f32.mrf.mxu0
  %1384 = vmatprep.mubr.f32.mxu0 0.0
  %1385 = vmatmul.mubr.f32.gmra.mxu0 %v1261
  %v1386 = vpop.f32.mrf.mxu0
  %v1387 = vadd.f32 %v1239, %v1386
  %v1388 = vpop.f32.mrf.mxu0
  %1389 = vmatprep.mubr.f32.mxu0 0.0
  %1390 = vmatmul.mubr.f32.gmra.mxu0 %v1264
  %v1391 = vpop.f32.mrf.mxu0
  %v1392 = vadd.f32 %v1239, %v1391
  %v1393 = vpop.f32.mrf.mxu0
  %1394 = vmatprep.mubr.f32.mxu0 0.0
  %1395 = vmatmul.mubr.f32.gmra.mxu0 %v1267
  %v1396 = vpop.f32.mrf.mxu0
  %v1397 = vadd.f32 %v1239, %v1396
  %v1398 = vpop.f32.mrf.mxu0
  %1399 = vmatprep.mubr.f32.mxu0 0.0
  %1400 = vmatmul.mubr.f32.gmra.mxu0 %v1270
  %v1401 = vpop.f32.mrf.mxu0
  %v1402 = vadd.f32 %v1239, %v1401
  %v1403 = vpop.f32.mrf.mxu0
  %1404 = vmatprep.mubr.f32.mxu0 0.0
  %1405 = vmatmul.mubr.f32.gmra.mxu0 %v1273
  %v1406 = vpop.f32.mrf.mxu0
  %v1407 = vadd.f32 %v1239, %v1406
  %v1408 = vpop.f32.mrf.mxu0
  %1409 = vmatprep.mubr.f32.mxu0 0.0
  %1410 = vmatmul.mubr.f32.gmra.mxu0 %v1276
  %v1411 = vpop.f32.mrf.mxu0
  %v1412 = vadd.f32 %v1239, %v1411
  %v1413 = vpop.f32.mrf.mxu0
  %1414 = vmatprep.mubr.f32.mxu0 0.0
  %1415 = vmatmul.mubr.f32.gmra.mxu0 %v1279
  %v1416 = vpop.f32.mrf.mxu0
  %v1417 = vadd.f32 %v1239, %v1416
  %v1418 = vpop.f32.mrf.mxu0
  %1419 = vmatprep.mubr.f32.mxu0 0.0
  %1420 = vmatmul.mubr.f32.gmra.mxu0 %v1282
  %v1421 = vpop.f32.mrf.mxu0
  %v1422 = vadd.f32 %v1239, %v1421
  %v1423 = vpop.f32.mrf.mxu0
  %1424 = vmatprep.mubr.f32.mxu0 0.0
  %1425 = vmatmul.mubr.f32.gmra.mxu0 %v1285
  %v1426 = vpop.f32.mrf.mxu0
  %v1427 = vadd.f32 %v1239, %v1426
  %v1428 = vpop.f32.mrf.mxu0
  %1429 = vmatprep.mubr.f32.mxu0 0.0
  %1430 = vmatmul.mubr.f32.gmra.mxu0 %v1288
  %v1431 = vpop.f32.mrf.mxu0
  %v1432 = vadd.f32 %v1239, %v1431
  %v1433 = vpop.f32.mrf.mxu0
  %1434 = vdwg.mxu0
  %v1435 = vmax.f32 %v1357, 0.0
  %v1436 = vmax.f32 %v1362, 0.0
  %v1437 = vmax.f32 %v1367, 0.0
  %v1438 = vmax.f32 %v1372, 0.0
  %v1439 = vmax.f32 %v1377, 0.0
  %v1440 = vmax.f32 %v1382, 0.0
  %v1441 = vmax.f32 %v1387, 0.0
  %v1442 = vmax.f32 %v1392, 0.0
  %v1443 = vmax.f32 %v1397, 0.0
  %v1444 = vmax.f32 %v1402, 0.0
  %v1445 = vmax.f32 %v1407, 0.0
  %v1446 = vmax.f32 %v1412, 0.0
  %v1447 = vmax.f32 %v1417, 0.0
  %v1448 = vmax.f32 %v1422, 0.0
  %v1449 = vmax.f32 %v1427, 0.0
  %v1450 = vmax.f32 %v1432, 0.0
  %v1451 = vlaneseq
  %v1452 = vshrl.u32 %v1451, 7
  %v1453 = vadd.s32 %v1452, 8
  %vm1454 = vcmp.lt.s32.totalorder %v1452, 10
  %vm1455 = vcmp.lt.s32.totalorder %v1453, 10
  %v1456 = vsel %vm1454, %v1435, -inf
  %v1457 = vsel %vm1455, %v1436, -inf
  %v1458 = vsel %vm1454, %v1437, -inf
  %v1459 = vsel %vm1455, %v1438, -inf
  %v1460 = vsel %vm1454, %v1439, -inf
  %v1461 = vsel %vm1455, %v1440, -inf
  %v1462 = vsel %vm1454, %v1441, -inf
  %v1463 = vsel %vm1455, %v1442, -inf
  %v1464 = vsel %vm1454, %v1443, -inf
  %v1465 = vsel %vm1455, %v1444, -inf
  %v1466 = vsel %vm1454, %v1445, -inf
  %v1467 = vsel %vm1455, %v1446, -inf
  %v1468 = vsel %vm1454, %v1447, -inf
  %v1469 = vsel %vm1455, %v1448, -inf
  %v1470 = vsel %vm1454, %v1449, -inf
  %v1471 = vsel %vm1455, %v1450, -inf
  %v1472 = vsel %vm1211, %v1456, -inf
  %v1473 = vsel %vm1211, %v1457, -inf
  %v1474 = vmax.f32 %v1472, %v1473
  %v1475 = vrot.slane %v1474, 4
  %v1476 = vmax.f32 %v1474, %v1475
  %v1477 = vrot.slane %v1476, 2
  %v1478 = vmax.f32 %v1476, %v1477
  %v1479 = vrot.slane %v1478, 1
  %v1480 = vmax.f32 %v1478, %v1479
  %v1481 = vsel %vm1211, %v1458, -inf
  %v1482 = vsel %vm1211, %v1459, -inf
  %v1483 = vmax.f32 %v1481, %v1482
  %v1484 = vrot.slane %v1483, 4
  %v1485 = vmax.f32 %v1483, %v1484
  %v1486 = vrot.slane %v1485, 2
  %v1487 = vmax.f32 %v1485, %v1486
  %v1488 = vrot.slane %v1487, 1
  %v1489 = vmax.f32 %v1487, %v1488
  %v1490 = vsel %vm1211, %v1460, -inf
  %v1491 = vsel %vm1211, %v1461, -inf
  %v1492 = vmax.f32 %v1490, %v1491
  %v1493 = vrot.slane %v1492, 4
  %v1494 = vmax.f32 %v1492, %v1493
  %v1495 = vrot.slane %v1494, 2
  %v1496 = vmax.f32 %v1494, %v1495
  %v1497 = vrot.slane %v1496, 1
  %v1498 = vmax.f32 %v1496, %v1497
  %v1499 = vsel %vm1211, %v1462, -inf
  %v1500 = vsel %vm1211, %v1463, -inf
  %v1501 = vmax.f32 %v1499, %v1500
  %v1502 = vrot.slane %v1501, 4
  %v1503 = vmax.f32 %v1501, %v1502
  %v1504 = vrot.slane %v1503, 2
  %v1505 = vmax.f32 %v1503, %v1504
  %v1506 = vrot.slane %v1505, 1
  %v1507 = vmax.f32 %v1505, %v1506
  %v1508 = vsel %vm1211, %v1464, -inf
  %v1509 = vsel %vm1211, %v1465, -inf
  %v1510 = vmax.f32 %v1508, %v1509
  %v1511 = vrot.slane %v1510, 4
  %v1512 = vmax.f32 %v1510, %v1511
  %v1513 = vrot.slane %v1512, 2
  %v1514 = vmax.f32 %v1512, %v1513
  %v1515 = vrot.slane %v1514, 1
  %v1516 = vmax.f32 %v1514, %v1515
  %v1517 = vsel %vm1211, %v1466, -inf
  %v1518 = vsel %vm1211, %v1467, -inf
  %v1519 = vmax.f32 %v1517, %v1518
  %v1520 = vrot.slane %v1519, 4
  %v1521 = vmax.f32 %v1519, %v1520
  %v1522 = vrot.slane %v1521, 2
  %v1523 = vmax.f32 %v1521, %v1522
  %v1524 = vrot.slane %v1523, 1
  %v1525 = vmax.f32 %v1523, %v1524
  %v1526 = vsel %vm1211, %v1468, -inf
  %v1527 = vsel %vm1211, %v1469, -inf
  %v1528 = vmax.f32 %v1526, %v1527
  %v1529 = vrot.slane %v1528, 4
  %v1530 = vmax.f32 %v1528, %v1529
  %v1531 = vrot.slane %v1530, 2
  %v1532 = vmax.f32 %v1530, %v1531
  %v1533 = vrot.slane %v1532, 1
  %v1534 = vmax.f32 %v1532, %v1533
  %v1535 = vsel %vm1211, %v1470, -inf
  %v1536 = vsel %vm1211, %v1471, -inf
  %v1537 = vmax.f32 %v1535, %v1536
  %v1538 = vrot.slane %v1537, 4
  %v1539 = vmax.f32 %v1537, %v1538
  %v1540 = vrot.slane %v1539, 2
  %v1541 = vmax.f32 %v1539, %v1540
  %v1542 = vrot.slane %v1541, 1
  %v1543 = vmax.f32 %v1541, %v1542
  %v1544 = vld [vmem:[%s7] sm:$0xff]
  %v1545 = vld [vmem:[%s7 + $0x8] sm:$0xff]
  %v1546 = vld [vmem:[%s7 + $0x10] sm:$0xff]
  %v1547 = vld [vmem:[%s7 + $0x18] sm:$0xff]
  %v1548 = vld [vmem:[%s8] sm:$0x1]
  %v1550 = vlaneseq
  %v1551 = vshrl.u32 %v1550, 7
  %v1552 = vsub.s32 0, %v1551
  %v1553 = vrot.slane %v1548, %v1552
  %vm1563 = vcmask 1041409
  %v1564 = vsel %vm1563, %v1489, %v1480
  %vm1565 = vcmask 1042434
  %v1566 = vsel %vm1565, %v1498, %v1564
  %vm1567 = vcmask 1043459
  %v1568 = vsel %vm1567, %v1507, %v1566
  %vm1569 = vcmask 1044484
  %v1570 = vsel %vm1569, %v1516, %v1568
  %vm1571 = vcmask 1045509
  %v1572 = vsel %vm1571, %v1525, %v1570
  %vm1573 = vcmask 1046534
  %v1574 = vsel %vm1573, %v1534, %v1572
  %vm1575 = vcmask 1047559
  %v1576 = vsel %vm1575, %v1543, %v1574
  %v1577 = vsel %vm1211, %v1576, 0
  %1579 = vmatprep.subr.mxu0 0.0
  %1580 = vmatpush1.msra.mxu0 0.0
  %1581 = vmatprep.subr.mxu0 0.0
  %1582 = vmatpush1.msra.mxu0 0.0
  %1583 = vmatprep.subr.mxu0 0.0
  %1584 = vmatpush1.msra.mxu0 0.0
  %1585 = vmatprep.subr.mxu0 0.0
  %1586 = vmatpush1.msra.mxu0 0.0
  %1587 = vmatprep.subr.mxu0 0.0
  %1588 = vmatpush1.msra.mxu0 0.0
  %1589 = vmatprep.subr.mxu0 0.0
  %1590 = vmatpush1.msra.mxu0 0.0
  %1591 = vmatprep.subr.mxu0 0.0
  %1592 = vmatpush1.msra.mxu0 0.0
  %1593 = vmatprep.subr.mxu0 0.0
  %1594 = vmatpush1.msra.mxu0 0.0
  %1595 = vmatprep.subr.mxu0 0.0
  %1596 = vmatpush1.msra.mxu0 0.0
  %1597 = vmatprep.subr.mxu0 0.0
  %1598 = vmatpush1.msra.mxu0 0.0
  %1599 = vmatprep.subr.mxu0 0.0
  %1600 = vmatpush1.msra.mxu0 0.0
  %1601 = vmatprep.subr.mxu0 0.0
  %1602 = vmatpush1.msra.mxu0 0.0
  %1603 = vmatprep.subr.mxu0 0.0
  %1604 = vmatpush1.msra.mxu0 %v1547
  %1605 = vmatprep.subr.mxu0 0.0
  %1606 = vmatpush1.msra.mxu0 %v1546
  %1607 = vmatprep.subr.mxu0 0.0
  %1608 = vmatpush1.msra.mxu0 %v1545
  %1609 = vmatprep.subr.mxu0 0.0
  %1610 = vmatpush1.msra.mxu0 %v1544
  %1611 = vmatprep.subr.mxu0 0.0
  %1612 = vmatpush2.msra.mxu0 0.0
  %1613 = vmatprep.subr.mxu0 0.0
  %1614 = vmatpush2.msra.mxu0 0.0
  %1615 = vmatprep.subr.mxu0 0.0
  %1616 = vmatpush2.msra.mxu0 0.0
  %1617 = vmatprep.subr.mxu0 0.0
  %1618 = vmatpush2.msra.mxu0 0.0
  %1619 = vmatprep.subr.mxu0 0.0
  %1620 = vmatpush2.msra.mxu0 0.0
  %1621 = vmatprep.subr.mxu0 0.0
  %1622 = vmatpush2.msra.mxu0 0.0
  %1623 = vmatprep.subr.mxu0 0.0
  %1624 = vmatpush2.msra.mxu0 0.0
  %1625 = vmatprep.subr.mxu0 0.0
  %1626 = vmatpush2.msra.mxu0 0.0
  %1627 = vmatprep.subr.mxu0 0.0
  %1628 = vmatpush2.msra.mxu0 0.0
  %1629 = vmatprep.subr.mxu0 0.0
  %1630 = vmatpush2.msra.mxu0 0.0
  %1631 = vmatprep.subr.mxu0 0.0
  %1632 = vmatpush2.msra.mxu0 0.0
  %1633 = vmatprep.subr.mxu0 0.0
  %1634 = vmatpush2.msra.mxu0 0.0
  %1635 = vmatprep.subr.mxu0 0.0
  %1636 = vmatpush2.msra.mxu0 0.0
  %1637 = vmatprep.subr.mxu0 0.0
  %1638 = vmatpush2.msra.mxu0 0.0
  %1639 = vmatprep.subr.mxu0 0.0
  %1640 = vmatpush2.msra.mxu0 0.0
  %1641 = vmatprep.subr.mxu0 0.0
  %1642 = vmatpush2.msra.mxu0 0.0
  %1643 = vmatprep.mubr.f32.mxu0 0.0
  %1644 = vmatmul.mubr.f32.gmra.mxu0 %v1577
  %v1645 = vpop.f32.mrf.mxu0
  %v1646 = vadd.f32 %v1553, %v1645
  %v1647 = vpop.f32.mrf.mxu0
  %1648 = vdwg.mxu0
  %v1649 = vmax.f32 %v1646, 0.0
  %v1650 = vld [vmem:[%s9] sm:$0xff]
  %v1651 = vld [vmem:[%s9 + $0x8] sm:$0xff]
  %v1652 = vld [vmem:[%s9 + $0x10] sm:$0xff]
  %v1653 = vld [vmem:[%s9 + $0x18] sm:$0xff]
  %v1654 = vld [vmem:[%s10] sm:$0x1]
  %v1656 = vlaneseq
  %v1657 = vshrl.u32 %v1656, 7
  %v1658 = vsub.s32 0, %v1657
  %v1659 = vrot.slane %v1654, %v1658
  %v1662 = vsel %vm1211, %v1649, 0
  %1664 = vmatprep.subr.mxu0 0.0
  %1665 = vmatpush1.msra.mxu0 0.0
  %1666 = vmatprep.subr.mxu0 0.0
  %1667 = vmatpush1.msra.mxu0 0.0
  %1668 = vmatprep.subr.mxu0 0.0
  %1669 = vmatpush1.msra.mxu0 0.0
  %1670 = vmatprep.subr.mxu0 0.0
  %1671 = vmatpush1.msra.mxu0 0.0
  %1672 = vmatprep.subr.mxu0 0.0
  %1673 = vmatpush1.msra.mxu0 0.0
  %1674 = vmatprep.subr.mxu0 0.0
  %1675 = vmatpush1.msra.mxu0 0.0
  %1676 = vmatprep.subr.mxu0 0.0
  %1677 = vmatpush1.msra.mxu0 0.0
  %1678 = vmatprep.subr.mxu0 0.0
  %1679 = vmatpush1.msra.mxu0 0.0
  %1680 = vmatprep.subr.mxu0 0.0
  %1681 = vmatpush1.msra.mxu0 0.0
  %1682 = vmatprep.subr.mxu0 0.0
  %1683 = vmatpush1.msra.mxu0 0.0
  %1684 = vmatprep.subr.mxu0 0.0
  %1685 = vmatpush1.msra.mxu0 0.0
  %1686 = vmatprep.subr.mxu0 0.0
  %1687 = vmatpush1.msra.mxu0 0.0
  %1688 = vmatprep.subr.mxu0 0.0
  %1689 = vmatpush1.msra.mxu0 %v1653
  %1690 = vmatprep.subr.mxu0 0.0
  %1691 = vmatpush1.msra.mxu0 %v1652
  %1692 = vmatprep.subr.mxu0 0.0
  %1693 = vmatpush1.msra.mxu0 %v1651
  %1694 = vmatprep.subr.mxu0 0.0
  %1695 = vmatpush1.msra.mxu0 %v1650
  %1696 = vmatprep.subr.mxu0 0.0
  %1697 = vmatpush2.msra.mxu0 0.0
  %1698 = vmatprep.subr.mxu0 0.0
  %1699 = vmatpush2.msra.mxu0 0.0
  %1700 = vmatprep.subr.mxu0 0.0
  %1701 = vmatpush2.msra.mxu0 0.0
  %1702 = vmatprep.subr.mxu0 0.0
  %1703 = vmatpush2.msra.mxu0 0.0
  %1704 = vmatprep.subr.mxu0 0.0
  %1705 = vmatpush2.msra.mxu0 0.0
  %1706 = vmatprep.subr.mxu0 0.0
  %1707 = vmatpush2.msra.mxu0 0.0
  %1708 = vmatprep.subr.mxu0 0.0
  %1709 = vmatpush2.msra.mxu0 0.0
  %1710 = vmatprep.subr.mxu0 0.0
  %1711 = vmatpush2.msra.mxu0 0.0
  %1712 = vmatprep.subr.mxu0 0.0
  %1713 = vmatpush2.msra.mxu0 0.0
  %1714 = vmatprep.subr.mxu0 0.0
  %1715 = vmatpush2.msra.mxu0 0.0
  %1716 = vmatprep.subr.mxu0 0.0
  %1717 = vmatpush2.msra.mxu0 0.0
  %1718 = vmatprep.subr.mxu0 0.0
  %1719 = vmatpush2.msra.mxu0 0.0
  %1720 = vmatprep.subr.mxu0 0.0
  %1721 = vmatpush2.msra.mxu0 0.0
  %1722 = vmatprep.subr.mxu0 0.0
  %1723 = vmatpush2.msra.mxu0 0.0
  %1724 = vmatprep.subr.mxu0 0.0
  %1725 = vmatpush2.msra.mxu0 0.0
  %1726 = vmatprep.subr.mxu0 0.0
  %1727 = vmatpush2.msra.mxu0 0.0
  %1728 = vmatprep.mubr.f32.mxu0 0.0
  %1729 = vmatmul.mubr.f32.gmra.mxu0 %v1662
  %v1730 = vpop.f32.mrf.mxu0
  %v1731 = vadd.f32 %v1659, %v1730
  %v1732 = vpop.f32.mrf.mxu0
  %1733 = vdwg.mxu0
  %1734 = vst [vmem:[%s11] sm:$0xff] %v1731
  // Predicated region
  $region46: #{sequence_classifier_forward.1} parent=0 // pred_check
    _
  $region47: #{sequence_classifier_forward.1} parent=0 // pred_check_branch
    %1736 = sbr.rel (0) target = $region49
  $region48: #{sequence_classifier_forward.1} parent=0 // pred_region
    _
  $region49: #{sequence_classifier_forward.1} parent=0 // pred_fallthru
    _
  // Predicated region
  $region50: #{sequence_classifier_forward.1} parent=0 // pred_check
    _
  $region51: #{sequence_classifier_forward.1} parent=0 // pred_check_branch
    %1738 = sbr.rel (0) target = $region53
  $region52: #{sequence_classifier_forward.1} parent=0 // pred_region
    _
  $region53: #{sequence_classifier_forward.1} parent=0 // pred_fallthru
    _

</llo_original>
